<compile_context>
chip_gen: v6e
topology: v6e:2x2x1
jax: 0.10.0
libtpu: 0.0.40
codegen_flags: <defaults>
</compile_context>

<pallas_src>
import math
from functools import partial

import jax
import jax.numpy as jnp
from jax.experimental import pallas as pl
from jax.experimental.pallas import tpu as pltpu


def _sif_partial_kernel(code_ref, mask_ref, num_ref, den_ref, *, max_shift: int):
    """Per-tile partial sums for every circular shift.

    code_ref: [tn, F, W] bf16 in {0,1}  (F on sublanes, W on lanes)
    mask_ref: [tn, W]    bf16 in {0,1}
    num_ref : [1, S, F]  f32  partial masked-XOR counts (per shift, per filter)
    den_ref : [1, S, 1]  f32  partial AND-mask counts   (per shift)
    """
    mask = mask_ref[...].astype(jnp.float32)               # [tn, W]
    code = code_ref[...].astype(jnp.float32)               # [tn, F, W]
    w = mask.shape[-1]

    nums = []
    dens = []
    # Static unroll over the small shift range (2*max_shift + 1 iterations).
    for shift in range(-max_shift, max_shift + 1):
        s = shift % w                                      # static, non-negative
        if s == 0:
            m_s, c_s = mask, code
        else:
            m_s = pltpu.roll(mask, s, axis=1)              # lane rotation (XLU)
            c_s = pltpu.roll(code, s, axis=2)
        and_m = mask * m_s                                 # logical_and, [tn, W]
        # (c ^ c') & m & m' == |c - c'| * (m * m') for {0,1} inputs.
        xor_m = jnp.abs(code - c_s) * and_m[:, None, :]    # [tn, F, W]

        nums.append(jnp.sum(xor_m, axis=(0, 2)))           # [F], f32 accumulation
        dens.append(jnp.sum(and_m))                        # scalar, f32

    # Single store per output per tile (avoids tiny per-shift partial stores).
    num_ref[0] = jnp.stack(nums, axis=0)                   # [S, F]
    den_ref[0] = jnp.stack(dens)[:, None]                  # [S, 1]


def match_sif_code(outputs, masks, *, filter_size, num_filters, max_shift,
                   block_rows=128):
    """Pallas equivalent of matchSIFCode(filter_size, num_filters, max_shift).forward."""
    margin = int(math.ceil(filter_size / 2))
    code = outputs[:, margin:-margin, :, :]                # [B, Hc, W, F]
    mask = masks[:, margin:-margin, :]                     # [B, Hc, W]
    B, Hc, W, F = code.shape
    assert F == num_filters
    N = B * Hc
    S = 2 * max_shift + 1

    # Lane-dense re-layout (wrapper-side plumbing, fuses crop+transpose+cast):
    #   code: [B, Hc, W, F] -> [N, F, W]   (shift axis W on lanes)
    #   mask: [B, Hc, W]    -> [N, W]
    code2 = jnp.transpose(code, (0, 1, 3, 2)).reshape(N, F, W).astype(jnp.bfloat16)
    mask2 = mask.reshape(N, W).astype(jnp.bfloat16)

    # Tile the fused batch*row axis.  tn is a multiple of 8 (sublane rule for
    # the 2-D mask block); pad N with zero rows (zero mask/code contribute
    # nothing to either numerator or denominator).
    tn = min(block_rows, N)
    tn = ((tn + 7) // 8) * 8
    G = pl.cdiv(max(N, tn), tn)
    n_pad = G * tn
    if n_pad != N:
        code2 = jnp.pad(code2, ((0, n_pad - N), (0, 0), (0, 0)))
        mask2 = jnp.pad(mask2, ((0, n_pad - N), (0, 0)))

    kernel = partial(_sif_partial_kernel, max_shift=max_shift)
    num_part, den_part = pl.pallas_call(
        kernel,
        out_shape=(
            jax.ShapeDtypeStruct((G, S, F), jnp.float32),
            jax.ShapeDtypeStruct((G, S, 1), jnp.float32),
        ),
        grid=(G,),
        in_specs=[
            pl.BlockSpec((tn, F, W), lambda g: (g, 0, 0)),
            pl.BlockSpec((tn, W), lambda g: (g, 0)),
        ],
        out_specs=(
            pl.BlockSpec((1, S, F), lambda g: (g, 0, 0)),
            pl.BlockSpec((1, S, 1), lambda g: (g, 0, 0)),
        ),
        compiler_params=pltpu.CompilerParams(
            dimension_semantics=("parallel",),       # per-tile outputs -> legal
            vmem_limit_bytes=32 * 1024 * 1024,       # safe on v5e/v6e/v7x
        ),
    )(code2, mask2)

    # Cheap epilogue in the wrapper: reduce per-tile partials, divide, global min.
    num_total = jnp.sum(num_part, axis=0)            # [S, F]
    den_total = jnp.sum(den_part, axis=0)            # [S, 1]
    scores = num_total / den_total                   # scoreC (0/0 -> NaN, same as ref)
    return jnp.min(scores)
    # TODO(synk): `targets` / nn.SmoothL1Loss are constructed but never used by
    # the reference forward(), so they are intentionally not implemented.


def match_sif_code_ref(outputs, masks, *, filter_size, num_filters, max_shift):
    """Pure-JAX reference mirroring the (intended) PyTorch semantics."""
    margin = int(math.ceil(filter_size / 2))
    code = outputs[:, margin:-margin, :, :] != 0
    mask = masks[:, margin:-margin, :] != 0
    scores = []
    for shift in range(-max_shift, max_shift + 1):
        and_mask = jnp.logical_and(mask, jnp.roll(mask, shift, axis=2))
        xor = jnp.logical_xor(code, jnp.roll(code, shift, axis=2))
        xor_m = jnp.logical_and(xor, and_mask[..., None])
        num = jnp.sum(xor_m, axis=(0, 1, 2)).astype(jnp.float32)
        scores.append(num / jnp.sum(and_mask).astype(jnp.float32))
    return jnp.min(jnp.stack(scores))


if __name__ == "__main__":
    # Small deterministic example consistent with the module's forward.
    # W = 128 keeps the lane axis dense even at toy size.
    filter_size = 7          # -> margin = 4
    num_filters = 8          # F
    max_shift = 3            # 7 shifts
    B, H, W = 2, 16, 128     # cropped rows Hc = H - 2*margin = 8

    key = jax.random.PRNGKey(0)
    k_code, k_mask = jax.random.split(key)
    outputs = jax.random.bernoulli(k_code, 0.5, (B, H, W, num_filters)).astype(jnp.float32)
    masks = jax.random.bernoulli(k_mask, 0.7, (B, H, W)).astype(jnp.float32)

    result = match_sif_code(
        outputs, masks,
        filter_size=filter_size, num_filters=num_filters, max_shift=max_shift,
    )
    result = jax.block_until_ready(result)

    expected = match_sif_code_ref(
        outputs, masks,
        filter_size=filter_size, num_filters=num_filters, max_shift=max_shift,
    )
    expected = jax.block_until_ready(expected)

    if not bool(jnp.allclose(result, expected, rtol=1e-4, atol=1e-5)):
        raise AssertionError(f"mismatch: pallas={result}, ref={expected}")

    print("KERNEL_OK")
</pallas_src>

<mosaic_0001>
module attributes {stable_mosaic.version = 11 : i64} {
  func.func @_sif_partial_kernel(%arg0: i32, %arg1: memref<16x8x128xbf16, #tpu.memory_space<vmem>>, %arg2: memref<16x128xbf16, #tpu.memory_space<vmem>>, %arg3: memref<1x7x8xf32, #tpu.memory_space<vmem>>, %arg4: memref<1x7x1xf32, #tpu.memory_space<vmem>>) attributes {dimension_semantics = [#tpu.dimension_semantics<parallel>], iteration_bounds = array<i64: 1>, scalar_prefetch = 0 : i64, scratch_operands = 0 : i64, tpu.core_type = #tpu.core_type<tc>, window_params = [{transform_indices = @transform_0, window_bounds = array<i64: 16, 8, 128>}, {transform_indices = @transform_1, window_bounds = array<i64: 16, 128>}, {transform_indices = @transform_2, window_bounds = array<i64: 1, 7, 8>}, {transform_indices = @transform_3, window_bounds = array<i64: 1, 7, 1>}]} {
    %c0 = arith.constant 0 : index
    %c0_0 = arith.constant 0 : index
    %0 = vector.load %arg2[%c0, %c0_0] : memref<16x128xbf16, #tpu.memory_space<vmem>>, vector<16x128xbf16>
    %1 = arith.extf %0 : vector<16x128xbf16> to vector<16x128xf32>
    %c0_1 = arith.constant 0 : index
    %c0_2 = arith.constant 0 : index
    %c0_3 = arith.constant 0 : index
    %2 = vector.load %arg1[%c0_1, %c0_2, %c0_3] : memref<16x8x128xbf16, #tpu.memory_space<vmem>>, vector<16x8x128xbf16>
    %3 = arith.extf %2 : vector<16x8x128xbf16> to vector<16x8x128xf32>
    %c125_i32 = arith.constant 125 : i32
    %4 = tpu.dynamic_rotate %1 by %c125_i32 dim 1 : vector<16x128xf32>, i32 -> vector<16x128xf32>
    %c125_i32_4 = arith.constant 125 : i32
    %5 = tpu.dynamic_rotate %3 by %c125_i32_4 dim 2 : vector<16x8x128xf32>, i32 -> vector<16x8x128xf32>
    %6 = arith.mulf %1, %4 : vector<16x128xf32>
    %7 = arith.subf %3, %5 : vector<16x8x128xf32>
    %8 = math.absf %7 : vector<16x8x128xf32>
    %9 = vector.shape_cast %6 : vector<16x128xf32> to vector<16x1x128xf32>
    %10 = vector.broadcast %9 : vector<16x1x128xf32> to vector<16x8x128xf32>
    %11 = arith.mulf %8, %10 : vector<16x8x128xf32>
    %cst = arith.constant dense<0.000000e+00> : vector<8xf32>
    %12 = vector.multi_reduction <add>, %11, %cst [0, 2] : vector<16x8x128xf32> to vector<8xf32>
    %13 = vector.shape_cast %6 : vector<16x128xf32> to vector<1x16x128xf32>
    %cst_5 = arith.constant dense<0.000000e+00> : vector<1xf32>
    %14 = vector.multi_reduction <add>, %13, %cst_5 [1, 2] : vector<1x16x128xf32> to vector<1xf32>
    %15 = vector.shape_cast %14 : vector<1xf32> to vector<1x1x1xf32>
    %16 = vector.extract %15[0, 0, 0] : f32 from vector<1x1x1xf32>
    %c126_i32 = arith.constant 126 : i32
    %17 = tpu.dynamic_rotate %1 by %c126_i32 dim 1 : vector<16x128xf32>, i32 -> vector<16x128xf32>
    %c126_i32_6 = arith.constant 126 : i32
    %18 = tpu.dynamic_rotate %3 by %c126_i32_6 dim 2 : vector<16x8x128xf32>, i32 -> vector<16x8x128xf32>
    %19 = arith.mulf %1, %17 : vector<16x128xf32>
    %20 = arith.subf %3, %18 : vector<16x8x128xf32>
    %21 = math.absf %20 : vector<16x8x128xf32>
    %22 = vector.shape_cast %19 : vector<16x128xf32> to vector<16x1x128xf32>
    %23 = vector.broadcast %22 : vector<16x1x128xf32> to vector<16x8x128xf32>
    %24 = arith.mulf %21, %23 : vector<16x8x128xf32>
    %cst_7 = arith.constant dense<0.000000e+00> : vector<8xf32>
    %25 = vector.multi_reduction <add>, %24, %cst_7 [0, 2] : vector<16x8x128xf32> to vector<8xf32>
    %26 = vector.shape_cast %19 : vector<16x128xf32> to vector<1x16x128xf32>
    %cst_8 = arith.constant dense<0.000000e+00> : vector<1xf32>
    %27 = vector.multi_reduction <add>, %26, %cst_8 [1, 2] : vector<1x16x128xf32> to vector<1xf32>
    %28 = vector.shape_cast %27 : vector<1xf32> to vector<1x1x1xf32>
    %29 = vector.extract %28[0, 0, 0] : f32 from vector<1x1x1xf32>
    %c127_i32 = arith.constant 127 : i32
    %30 = tpu.dynamic_rotate %1 by %c127_i32 dim 1 : vector<16x128xf32>, i32 -> vector<16x128xf32>
    %c127_i32_9 = arith.constant 127 : i32
    %31 = tpu.dynamic_rotate %3 by %c127_i32_9 dim 2 : vector<16x8x128xf32>, i32 -> vector<16x8x128xf32>
    %32 = arith.mulf %1, %30 : vector<16x128xf32>
    %33 = arith.subf %3, %31 : vector<16x8x128xf32>
    %34 = math.absf %33 : vector<16x8x128xf32>
    %35 = vector.shape_cast %32 : vector<16x128xf32> to vector<16x1x128xf32>
    %36 = vector.broadcast %35 : vector<16x1x128xf32> to vector<16x8x128xf32>
    %37 = arith.mulf %34, %36 : vector<16x8x128xf32>
    %cst_10 = arith.constant dense<0.000000e+00> : vector<8xf32>
    %38 = vector.multi_reduction <add>, %37, %cst_10 [0, 2] : vector<16x8x128xf32> to vector<8xf32>
    %39 = vector.shape_cast %32 : vector<16x128xf32> to vector<1x16x128xf32>
    %cst_11 = arith.constant dense<0.000000e+00> : vector<1xf32>
    %40 = vector.multi_reduction <add>, %39, %cst_11 [1, 2] : vector<1x16x128xf32> to vector<1xf32>
    %41 = vector.shape_cast %40 : vector<1xf32> to vector<1x1x1xf32>
    %42 = vector.extract %41[0, 0, 0] : f32 from vector<1x1x1xf32>
    %43 = arith.mulf %1, %1 : vector<16x128xf32>
    %44 = arith.subf %3, %3 : vector<16x8x128xf32>
    %45 = math.absf %44 : vector<16x8x128xf32>
    %46 = vector.shape_cast %43 : vector<16x128xf32> to vector<16x1x128xf32>
    %47 = vector.broadcast %46 : vector<16x1x128xf32> to vector<16x8x128xf32>
    %48 = arith.mulf %45, %47 : vector<16x8x128xf32>
    %cst_12 = arith.constant dense<0.000000e+00> : vector<8xf32>
    %49 = vector.multi_reduction <add>, %48, %cst_12 [0, 2] : vector<16x8x128xf32> to vector<8xf32>
    %50 = vector.shape_cast %43 : vector<16x128xf32> to vector<1x16x128xf32>
    %cst_13 = arith.constant dense<0.000000e+00> : vector<1xf32>
    %51 = vector.multi_reduction <add>, %50, %cst_13 [1, 2] : vector<1x16x128xf32> to vector<1xf32>
    %52 = vector.shape_cast %51 : vector<1xf32> to vector<1x1x1xf32>
    %53 = vector.extract %52[0, 0, 0] : f32 from vector<1x1x1xf32>
    %c1_i32 = arith.constant 1 : i32
    %54 = tpu.dynamic_rotate %1 by %c1_i32 dim 1 : vector<16x128xf32>, i32 -> vector<16x128xf32>
    %c1_i32_14 = arith.constant 1 : i32
    %55 = tpu.dynamic_rotate %3 by %c1_i32_14 dim 2 : vector<16x8x128xf32>, i32 -> vector<16x8x128xf32>
    %56 = arith.mulf %1, %54 : vector<16x128xf32>
    %57 = arith.subf %3, %55 : vector<16x8x128xf32>
    %58 = math.absf %57 : vector<16x8x128xf32>
    %59 = vector.shape_cast %56 : vector<16x128xf32> to vector<16x1x128xf32>
    %60 = vector.broadcast %59 : vector<16x1x128xf32> to vector<16x8x128xf32>
    %61 = arith.mulf %58, %60 : vector<16x8x128xf32>
    %cst_15 = arith.constant dense<0.000000e+00> : vector<8xf32>
    %62 = vector.multi_reduction <add>, %61, %cst_15 [0, 2] : vector<16x8x128xf32> to vector<8xf32>
    %63 = vector.shape_cast %56 : vector<16x128xf32> to vector<1x16x128xf32>
    %cst_16 = arith.constant dense<0.000000e+00> : vector<1xf32>
    %64 = vector.multi_reduction <add>, %63, %cst_16 [1, 2] : vector<1x16x128xf32> to vector<1xf32>
    %65 = vector.shape_cast %64 : vector<1xf32> to vector<1x1x1xf32>
    %66 = vector.extract %65[0, 0, 0] : f32 from vector<1x1x1xf32>
    %c2_i32 = arith.constant 2 : i32
    %67 = tpu.dynamic_rotate %1 by %c2_i32 dim 1 : vector<16x128xf32>, i32 -> vector<16x128xf32>
    %c2_i32_17 = arith.constant 2 : i32
    %68 = tpu.dynamic_rotate %3 by %c2_i32_17 dim 2 : vector<16x8x128xf32>, i32 -> vector<16x8x128xf32>
    %69 = arith.mulf %1, %67 : vector<16x128xf32>
    %70 = arith.subf %3, %68 : vector<16x8x128xf32>
    %71 = math.absf %70 : vector<16x8x128xf32>
    %72 = vector.shape_cast %69 : vector<16x128xf32> to vector<16x1x128xf32>
    %73 = vector.broadcast %72 : vector<16x1x128xf32> to vector<16x8x128xf32>
    %74 = arith.mulf %71, %73 : vector<16x8x128xf32>
    %cst_18 = arith.constant dense<0.000000e+00> : vector<8xf32>
    %75 = vector.multi_reduction <add>, %74, %cst_18 [0, 2] : vector<16x8x128xf32> to vector<8xf32>
    %76 = vector.shape_cast %69 : vector<16x128xf32> to vector<1x16x128xf32>
    %cst_19 = arith.constant dense<0.000000e+00> : vector<1xf32>
    %77 = vector.multi_reduction <add>, %76, %cst_19 [1, 2] : vector<1x16x128xf32> to vector<1xf32>
    %78 = vector.shape_cast %77 : vector<1xf32> to vector<1x1x1xf32>
    %79 = vector.extract %78[0, 0, 0] : f32 from vector<1x1x1xf32>
    %c3_i32 = arith.constant 3 : i32
    %80 = tpu.dynamic_rotate %1 by %c3_i32 dim 1 : vector<16x128xf32>, i32 -> vector<16x128xf32>
    %c3_i32_20 = arith.constant 3 : i32
    %81 = tpu.dynamic_rotate %3 by %c3_i32_20 dim 2 : vector<16x8x128xf32>, i32 -> vector<16x8x128xf32>
    %82 = arith.mulf %1, %80 : vector<16x128xf32>
    %83 = arith.subf %3, %81 : vector<16x8x128xf32>
    %84 = math.absf %83 : vector<16x8x128xf32>
    %85 = vector.shape_cast %82 : vector<16x128xf32> to vector<16x1x128xf32>
    %86 = vector.broadcast %85 : vector<16x1x128xf32> to vector<16x8x128xf32>
    %87 = arith.mulf %84, %86 : vector<16x8x128xf32>
    %cst_21 = arith.constant dense<0.000000e+00> : vector<8xf32>
    %88 = vector.multi_reduction <add>, %87, %cst_21 [0, 2] : vector<16x8x128xf32> to vector<8xf32>
    %89 = vector.shape_cast %82 : vector<16x128xf32> to vector<1x16x128xf32>
    %cst_22 = arith.constant dense<0.000000e+00> : vector<1xf32>
    %90 = vector.multi_reduction <add>, %89, %cst_22 [1, 2] : vector<1x16x128xf32> to vector<1xf32>
    %91 = vector.shape_cast %90 : vector<1xf32> to vector<1x1x1xf32>
    %92 = vector.extract %91[0, 0, 0] : f32 from vector<1x1x1xf32>
    %93 = vector.shape_cast %12 : vector<8xf32> to vector<1x8xf32>
    %94 = vector.shape_cast %25 : vector<8xf32> to vector<1x8xf32>
    %95 = vector.shape_cast %38 : vector<8xf32> to vector<1x8xf32>
    %96 = vector.shape_cast %49 : vector<8xf32> to vector<1x8xf32>
    %97 = vector.shape_cast %62 : vector<8xf32> to vector<1x8xf32>
    %98 = vector.shape_cast %75 : vector<8xf32> to vector<1x8xf32>
    %99 = vector.shape_cast %88 : vector<8xf32> to vector<1x8xf32>
    %100 = tpu.concatenate %93, %94, %95, %96, %97, %98, %99 in 0 : vector<1x8xf32>, vector<1x8xf32>, vector<1x8xf32>, vector<1x8xf32>, vector<1x8xf32>, vector<1x8xf32>, vector<1x8xf32> -> vector<7x8xf32>
    %c0_23 = arith.constant 0 : index
    %c0_24 = arith.constant 0 : index
    %c0_25 = arith.constant 0 : index
    %101 = vector.load %arg3[%c0_23, %c0_24, %c0_25] : memref<1x7x8xf32, #tpu.memory_space<vmem>>, vector<1x7x8xf32>
    %102 = vector.shape_cast %101 : vector<1x7x8xf32> to vector<7x8xf32>
    %103 = vector.shape_cast %100 : vector<7x8xf32> to vector<1x7x8xf32>
    tpu.vector_store %arg3[%c0_23, %c0_24, %c0_25], %103 {strides = array<i32>} : memref<1x7x8xf32, #tpu.memory_space<vmem>>, vector<1x7x8xf32>,
    %104 = vector.broadcast %16 : f32 to vector<1xf32>
    %105 = vector.broadcast %29 : f32 to vector<1xf32>
    %106 = vector.broadcast %42 : f32 to vector<1xf32>
    %107 = vector.broadcast %53 : f32 to vector<1xf32>
    %108 = vector.broadcast %66 : f32 to vector<1xf32>
    %109 = vector.broadcast %79 : f32 to vector<1xf32>
    %110 = vector.broadcast %92 : f32 to vector<1xf32>
    %111 = tpu.concatenate %104, %105, %106, %107, %108, %109, %110 in 0 : vector<1xf32>, vector<1xf32>, vector<1xf32>, vector<1xf32>, vector<1xf32>, vector<1xf32>, vector<1xf32> -> vector<7xf32>
    %112 = vector.shape_cast %111 : vector<7xf32> to vector<7x1xf32>
    %c0_26 = arith.constant 0 : index
    %c0_27 = arith.constant 0 : index
    %c0_28 = arith.constant 0 : index
    %113 = vector.load %arg4[%c0_26, %c0_27, %c0_28] : memref<1x7x1xf32, #tpu.memory_space<vmem>>, vector<1x7x1xf32>
    %114 = vector.shape_cast %113 : vector<1x7x1xf32> to vector<7x1xf32>
    %115 = vector.shape_cast %112 : vector<7x1xf32> to vector<1x7x1xf32>
    tpu.vector_store %arg4[%c0_26, %c0_27, %c0_28], %115 {strides = array<i32>} : memref<1x7x1xf32, #tpu.memory_space<vmem>>, vector<1x7x1xf32>,
    return
  }
  func.func @transform_0(%arg0: i32) -> (i32, i32, i32) {
    %c0_i32 = arith.constant 0 : i32
    %c0_i32_0 = arith.constant 0 : i32
    %c0_i32_1 = arith.constant 0 : i32
    return %arg0, %c0_i32, %c0_i32_0 : i32, i32, i32
  }
  func.func @transform_1(%arg0: i32) -> (i32, i32) {
    %c0_i32 = arith.constant 0 : i32
    %c0_i32_0 = arith.constant 0 : i32
    return %arg0, %c0_i32 : i32, i32
  }
  func.func @transform_2(%arg0: i32) -> (i32, i32, i32) {
    %c0_i32 = arith.constant 0 : i32
    %c0_i32_0 = arith.constant 0 : i32
    %c0_i32_1 = arith.constant 0 : i32
    return %arg0, %c0_i32, %c0_i32_0 : i32, i32, i32
  }
  func.func @transform_3(%arg0: i32) -> (i32, i32, i32) {
    %c0_i32 = arith.constant 0 : i32
    %c0_i32_0 = arith.constant 0 : i32
    %c0_i32_1 = arith.constant 0 : i32
    return %arg0, %c0_i32, %c0_i32_0 : i32, i32, i32
  }
}

</mosaic_0001>

<llo_original>
// kernel: tpu_custom_call.1
$region0: #{tpu_custom_call.1}
  #allocation0 [shape = 'u32[]', space=smem, size = 0x4, offset = 0x4, fixed_abs, tag = 'smem constant byte address 0x4 - core index']
  #allocation1 [shape = 'u32[144,128]{1,0:T(1,128)}', space=vmem, size = 0x12000, scoped, tag = 'internal scratch']
  %s0 = inlined_call_operand.hbm [shape: bf16[16,8,128], index: 0, kind: input, shape index: {}]
  %s1 = inlined_call_operand.hbm [shape: bf16[16,128], index: 1, kind: input, shape index: {}]
  %s2 = inlined_call_operand.vmem [shape: f32[1,7,8], index: 2, kind: output, shape index: {0}]
  %s3 = inlined_call_operand.vmem [shape: f32[1,7,1], index: 3, kind: output, shape index: {1}]
  %4 = xla_tuple %s2, %s3
  %s5 = sld [smem:[#allocation0]]
  $region34: #{tpu_custom_call.1} parent=0
    _
  %s7 = ssub.s32 1, %s5
  %s8 = scalar_select 0, %s7, %s5
  $region1: #{tpu_custom_call.1} parent=0
    #allocation2 [shape = 'u8[32768]{0}', space=vmem, size = 0x8000, scoped, tag = 'input window, operand 0, single buffered']
    #allocation3 [shape = 's32[1]{0}', space=sflag, size = 0x4, scoped, tag = 'scoped memory for tpu_custom_call.1']
    #allocation4 [shape = 'u8[4096]{0}', space=vmem, size = 0x1000, scoped, tag = 'input window, operand 1, single buffered']
    #allocation5 [shape = 's32[1]{0}', space=sflag, size = 0x4, scoped, tag = 'scoped memory for tpu_custom_call.1']
    %9 = vsyncpa [#allocation3], 0
    %10 = vsyncpa [#allocation5], 0
    // Predicated region
    $region2: #{tpu_custom_call.1} parent=1 // pred_check
      _
    $region3: #{tpu_custom_call.1} parent=1 // pred_check_branch
      %12 = sbr.rel (0) target = $region5
    $region4: #{tpu_custom_call.1} parent=1 // pred_region
      %s14 = ssub.s32 1024, 1024
      %15 = vsyncadd [#allocation3], %s14
      %s16 = sshll.u32 [#allocation2], 4
      %s17 = int_to_ptr.vmem [resolvable:$true] %s16
      %22 = dma.hbm_to_vmem [thread:$0]  %s0, 1024, %s17, [#allocation3], 64, 64, 4
    $region5: #{tpu_custom_call.1} parent=1 // pred_fallthru
      _
    // Predicated region
    $region6: #{tpu_custom_call.1} parent=1 // pred_check
      _
    $region7: #{tpu_custom_call.1} parent=1 // pred_check_branch
      %24 = sbr.rel (0) target = $region9
    $region8: #{tpu_custom_call.1} parent=1 // pred_region
      %s26 = ssub.s32 128, 128
      %27 = vsyncadd [#allocation5], %s26
      %s28 = sshll.u32 [#allocation4], 4
      %s29 = int_to_ptr.vmem [resolvable:$true] %s28
      %34 = dma.hbm_to_vmem [thread:$0]  %s1, 128, %s29, [#allocation5], 64, 64, 4
    $region9: #{tpu_custom_call.1} parent=1 // pred_fallthru
      _
    // Predicated region
    $region10: #{tpu_custom_call.1} parent=1 // pred_check
      _
    $region11: #{tpu_custom_call.1} parent=1 // pred_check_branch
      %36 = sbr.rel (0) target = $region13
    $region12: #{tpu_custom_call.1} parent=1 // pred_region
      %37 = dma.done [#allocation3], 1024
    $region13: #{tpu_custom_call.1} parent=1 // pred_fallthru
      _
    // Predicated region
    $region14: #{tpu_custom_call.1} parent=1 // pred_check
      _
    $region15: #{tpu_custom_call.1} parent=1 // pred_check_branch
      %39 = sbr.rel (0) target = $region17
    $region16: #{tpu_custom_call.1} parent=1 // pred_region
      %40 = dma.done [#allocation5], 128
    $region17: #{tpu_custom_call.1} parent=1 // pred_fallthru
      _
    %v41 = vld [vmem:[#allocation4] sm:$0xf]
    %v42 = vld [vmem:[#allocation4 + $0x4] sm:$0xf]
    %v43 = vunpack.c.l.bf16 %v41
    %v44 = vunpack.c.l.bf16 %v42
    %v45 = vld [vmem:[#allocation2] sm:$0xf]
    %v46 = vld [vmem:[#allocation2 + $0x4] sm:$0xf]
    %v47 = vld [vmem:[#allocation2 + $0x8] sm:$0xf]
    %v48 = vld [vmem:[#allocation2 + $0xc] sm:$0xf]
    %v49 = vld [vmem:[#allocation2 + $0x10] sm:$0xf]
    %v50 = vld [vmem:[#allocation2 + $0x14] sm:$0xf]
    %v51 = vld [vmem:[#allocation2 + $0x18] sm:$0xf]
    %v52 = vld [vmem:[#allocation2 + $0x1c] sm:$0xf]
    %v53 = vld [vmem:[#allocation2 + $0x20] sm:$0xf]
    %v54 = vld [vmem:[#allocation2 + $0x24] sm:$0xf]
    %v55 = vld [vmem:[#allocation2 + $0x28] sm:$0xf]
    %v56 = vld [vmem:[#allocation2 + $0x2c] sm:$0xf]
    %v57 = vld [vmem:[#allocation2 + $0x30] sm:$0xf]
    %v58 = vld [vmem:[#allocation2 + $0x34] sm:$0xf]
    %v59 = vld [vmem:[#allocation2 + $0x38] sm:$0xf]
    %v60 = vld [vmem:[#allocation2 + $0x3c] sm:$0xf]
    %v61 = vunpack.c.l.bf16 %v45
    %v62 = vunpack.c.l.bf16 %v46
    %v63 = vunpack.c.l.bf16 %v47
    %v64 = vunpack.c.l.bf16 %v48
    %v65 = vunpack.c.l.bf16 %v49
    %v66 = vunpack.c.l.bf16 %v50
    %v67 = vunpack.c.l.bf16 %v51
    %v68 = vunpack.c.l.bf16 %v52
    %v69 = vunpack.c.l.bf16 %v53
    %v70 = vunpack.c.l.bf16 %v54
    %v71 = vunpack.c.l.bf16 %v55
    %v72 = vunpack.c.l.bf16 %v56
    %v73 = vunpack.c.l.bf16 %v57
    %v74 = vunpack.c.l.bf16 %v58
    %v75 = vunpack.c.l.bf16 %v59
    %v76 = vunpack.c.l.bf16 %v60
    %77 = vrot.lane.b32.xlu0 %v43, 125
    %v78 = vpop.permute.xlu0 %77
    %79 = vrot.lane.b32.xlu0 %v44, 125
    %v80 = vpop.permute.xlu0 %79
    %81 = vrot.lane.b32.xlu0 %v61, 125
    %v82 = vpop.permute.xlu0 %81
    %83 = vrot.lane.b32.xlu0 %v62, 125
    %v84 = vpop.permute.xlu0 %83
    %85 = vrot.lane.b32.xlu0 %v63, 125
    %v86 = vpop.permute.xlu0 %85
    %87 = vrot.lane.b32.xlu0 %v64, 125
    %v88 = vpop.permute.xlu0 %87
    %89 = vrot.lane.b32.xlu0 %v65, 125
    %v90 = vpop.permute.xlu0 %89
    %91 = vrot.lane.b32.xlu0 %v66, 125
    %v92 = vpop.permute.xlu0 %91
    %93 = vrot.lane.b32.xlu0 %v67, 125
    %v94 = vpop.permute.xlu0 %93
    %95 = vrot.lane.b32.xlu0 %v68, 125
    %v96 = vpop.permute.xlu0 %95
    %97 = vrot.lane.b32.xlu0 %v69, 125
    %v98 = vpop.permute.xlu0 %97
    %99 = vrot.lane.b32.xlu0 %v70, 125
    %v100 = vpop.permute.xlu0 %99
    %101 = vrot.lane.b32.xlu0 %v71, 125
    %v102 = vpop.permute.xlu0 %101
    %103 = vrot.lane.b32.xlu0 %v72, 125
    %v104 = vpop.permute.xlu0 %103
    %105 = vrot.lane.b32.xlu0 %v73, 125
    %v106 = vpop.permute.xlu0 %105
    %107 = vrot.lane.b32.xlu0 %v74, 125
    %v108 = vpop.permute.xlu0 %107
    %109 = vrot.lane.b32.xlu0 %v75, 125
    %v110 = vpop.permute.xlu0 %109
    %111 = vrot.lane.b32.xlu0 %v76, 125
    %v112 = vpop.permute.xlu0 %111
    %v113 = vmul.f32 %v43, %v78
    %v114 = vmul.f32 %v44, %v80
    %v115 = vsub.f32 %v61, %v82
    %v116 = vsub.f32 %v62, %v84
    %v117 = vsub.f32 %v63, %v86
    %v118 = vsub.f32 %v64, %v88
    %v119 = vsub.f32 %v65, %v90
    %v120 = vsub.f32 %v66, %v92
    %v121 = vsub.f32 %v67, %v94
    %v122 = vsub.f32 %v68, %v96
    %v123 = vsub.f32 %v69, %v98
    %v124 = vsub.f32 %v70, %v100
    %v125 = vsub.f32 %v71, %v102
    %v126 = vsub.f32 %v72, %v104
    %v127 = vsub.f32 %v73, %v106
    %v128 = vsub.f32 %v74, %v108
    %v129 = vsub.f32 %v75, %v110
    %v130 = vsub.f32 %v76, %v112
    %v131 = vand.u32 2147483647, %v115
    %v132 = vand.u32 2147483647, %v116
    %v133 = vand.u32 2147483647, %v117
    %v134 = vand.u32 2147483647, %v118
    %v135 = vand.u32 2147483647, %v119
    %v136 = vand.u32 2147483647, %v120
    %v137 = vand.u32 2147483647, %v121
    %v138 = vand.u32 2147483647, %v122
    %v139 = vand.u32 2147483647, %v123
    %v140 = vand.u32 2147483647, %v124
    %v141 = vand.u32 2147483647, %v125
    %v142 = vand.u32 2147483647, %v126
    %v143 = vand.u32 2147483647, %v127
    %v144 = vand.u32 2147483647, %v128
    %v145 = vand.u32 2147483647, %v129
    %v146 = vand.u32 2147483647, %v130
    %v149 = vcombine.high %v113, %v113
    %v151 = vunpack.c.l.s4 1966171168
    %v152 = vunpack.c.0.s8 %v151
    %v153 = vlaneseq
    %v154 = vshrl.u32 %v153, 7
    %v155 = vsub.s32 %v152, %v154
    %v156 = vrot.slane %v113, %v155
    %v158 = vunpack.c.l.s4 1966171168
    %v159 = vunpack.c.0.s8 %v158
    %v160 = vlaneseq
    %v161 = vshrl.u32 %v160, 7
    %v162 = vsub.s32 %v159, %v161
    %v163 = vrot.slane %v149, %v162
    %v164 = vcombine.high %v156, %v156
    %v165 = vcombine.high %v163, %v163
    %v167 = vunpack.c.l.s4 1966171168
    %v168 = vunpack.c.0.s8 %v167
    %v169 = vlaneseq
    %v170 = vshrl.u32 %v169, 7
    %v171 = vsub.s32 %v168, %v170
    %v172 = vrot.slane %v156, %v171
    %v174 = vunpack.c.l.s4 1966171168
    %v175 = vunpack.c.0.s8 %v174
    %v176 = vlaneseq
    %v177 = vshrl.u32 %v176, 7
    %v178 = vsub.s32 %v175, %v177
    %v179 = vrot.slane %v163, %v178
    %v181 = vunpack.c.l.s4 1966171168
    %v182 = vunpack.c.0.s8 %v181
    %v183 = vlaneseq
    %v184 = vshrl.u32 %v183, 7
    %v185 = vsub.s32 %v182, %v184
    %v186 = vrot.slane %v164, %v185
    %v188 = vunpack.c.l.s4 1966171168
    %v189 = vunpack.c.0.s8 %v188
    %v190 = vlaneseq
    %v191 = vshrl.u32 %v190, 7
    %v192 = vsub.s32 %v189, %v191
    %v193 = vrot.slane %v165, %v192
    %v194 = vcombine.high %v172, %v172
    %v195 = vcombine.high %v179, %v179
    %v196 = vcombine.high %v186, %v186
    %v197 = vcombine.high %v193, %v193
    %v198 = vcombine.high %v114, %v114
    %v200 = vunpack.c.l.s4 1966171168
    %v201 = vunpack.c.0.s8 %v200
    %v202 = vlaneseq
    %v203 = vshrl.u32 %v202, 7
    %v204 = vsub.s32 %v201, %v203
    %v205 = vrot.slane %v114, %v204
    %v207 = vunpack.c.l.s4 1966171168
    %v208 = vunpack.c.0.s8 %v207
    %v209 = vlaneseq
    %v210 = vshrl.u32 %v209, 7
    %v211 = vsub.s32 %v208, %v210
    %v212 = vrot.slane %v198, %v211
    %v213 = vcombine.high %v205, %v205
    %v214 = vcombine.high %v212, %v212
    %v216 = vunpack.c.l.s4 1966171168
    %v217 = vunpack.c.0.s8 %v216
    %v218 = vlaneseq
    %v219 = vshrl.u32 %v218, 7
    %v220 = vsub.s32 %v217, %v219
    %v221 = vrot.slane %v205, %v220
    %v223 = vunpack.c.l.s4 1966171168
    %v224 = vunpack.c.0.s8 %v223
    %v225 = vlaneseq
    %v226 = vshrl.u32 %v225, 7
    %v227 = vsub.s32 %v224, %v226
    %v228 = vrot.slane %v212, %v227
    %v230 = vunpack.c.l.s4 1966171168
    %v231 = vunpack.c.0.s8 %v230
    %v232 = vlaneseq
    %v233 = vshrl.u32 %v232, 7
    %v234 = vsub.s32 %v231, %v233
    %v235 = vrot.slane %v213, %v234
    %v237 = vunpack.c.l.s4 1966171168
    %v238 = vunpack.c.0.s8 %v237
    %v239 = vlaneseq
    %v240 = vshrl.u32 %v239, 7
    %v241 = vsub.s32 %v238, %v240
    %v242 = vrot.slane %v214, %v241
    %v243 = vcombine.high %v221, %v221
    %v244 = vcombine.high %v228, %v228
    %v245 = vcombine.high %v235, %v235
    %v246 = vcombine.high %v242, %v242
    %v247 = vlaneseq
    %v248 = vshrl.u32 %v247, 7
    %v249 = vsub.s32 0, %v248
    %v250 = vrot.slane %v172, %v249
    %v251 = vlaneseq
    %v252 = vshrl.u32 %v251, 7
    %v253 = vsub.s32 0, %v252
    %v254 = vrot.slane %v186, %v253
    %v255 = vlaneseq
    %v256 = vshrl.u32 %v255, 7
    %v257 = vsub.s32 0, %v256
    %v258 = vrot.slane %v194, %v257
    %v259 = vlaneseq
    %v260 = vshrl.u32 %v259, 7
    %v261 = vsub.s32 0, %v260
    %v262 = vrot.slane %v196, %v261
    %v263 = vlaneseq
    %v264 = vshrl.u32 %v263, 7
    %v265 = vsub.s32 0, %v264
    %v266 = vrot.slane %v179, %v265
    %v267 = vlaneseq
    %v268 = vshrl.u32 %v267, 7
    %v269 = vsub.s32 0, %v268
    %v270 = vrot.slane %v193, %v269
    %v271 = vlaneseq
    %v272 = vshrl.u32 %v271, 7
    %v273 = vsub.s32 0, %v272
    %v274 = vrot.slane %v195, %v273
    %v275 = vlaneseq
    %v276 = vshrl.u32 %v275, 7
    %v277 = vsub.s32 0, %v276
    %v278 = vrot.slane %v197, %v277
    %v279 = vlaneseq
    %v280 = vshrl.u32 %v279, 7
    %v281 = vsub.s32 0, %v280
    %v282 = vrot.slane %v221, %v281
    %v283 = vlaneseq
    %v284 = vshrl.u32 %v283, 7
    %v285 = vsub.s32 0, %v284
    %v286 = vrot.slane %v235, %v285
    %v287 = vlaneseq
    %v288 = vshrl.u32 %v287, 7
    %v289 = vsub.s32 0, %v288
    %v290 = vrot.slane %v243, %v289
    %v291 = vlaneseq
    %v292 = vshrl.u32 %v291, 7
    %v293 = vsub.s32 0, %v292
    %v294 = vrot.slane %v245, %v293
    %v295 = vlaneseq
    %v296 = vshrl.u32 %v295, 7
    %v297 = vsub.s32 0, %v296
    %v298 = vrot.slane %v228, %v297
    %v299 = vlaneseq
    %v300 = vshrl.u32 %v299, 7
    %v301 = vsub.s32 0, %v300
    %v302 = vrot.slane %v242, %v301
    %v303 = vlaneseq
    %v304 = vshrl.u32 %v303, 7
    %v305 = vsub.s32 0, %v304
    %v306 = vrot.slane %v244, %v305
    %v307 = vlaneseq
    %v308 = vshrl.u32 %v307, 7
    %v309 = vsub.s32 0, %v308
    %v310 = vrot.slane %v246, %v309
    %v327 = vmul.f32 %v131, %v250
    %v328 = vmul.f32 %v132, %v254
    %v329 = vmul.f32 %v133, %v258
    %v330 = vmul.f32 %v134, %v262
    %v331 = vmul.f32 %v135, %v266
    %v332 = vmul.f32 %v136, %v270
    %v333 = vmul.f32 %v137, %v274
    %v334 = vmul.f32 %v138, %v278
    %v335 = vmul.f32 %v139, %v282
    %v336 = vmul.f32 %v140, %v286
    %v337 = vmul.f32 %v141, %v290
    %v338 = vmul.f32 %v142, %v294
    %v339 = vmul.f32 %v143, %v298
    %v340 = vmul.f32 %v144, %v302
    %v341 = vmul.f32 %v145, %v306
    %v342 = vmul.f32 %v146, %v310
    %v343 = vadd.f32 %v327, %v328
    %v344 = vadd.f32 %v343, %v329
    %v345 = vadd.f32 %v344, %v330
    %v346 = vadd.f32 %v345, %v331
    %v347 = vadd.f32 %v346, %v332
    %v348 = vadd.f32 %v347, %v333
    %v349 = vadd.f32 %v348, %v334
    %v350 = vadd.f32 %v349, %v335
    %v351 = vadd.f32 %v350, %v336
    %v352 = vadd.f32 %v351, %v337
    %v353 = vadd.f32 %v352, %v338
    %v354 = vadd.f32 %v353, %v339
    %v355 = vadd.f32 %v354, %v340
    %v356 = vadd.f32 %v355, %v341
    %v357 = vadd.f32 %v356, %v342
    %358 = vadd.xlane.f32.xlu0 %v357
    %v359 = vpop.xlane.xlu0 %358
    %v360 = vadd.f32 %v113, %v114
    %361 = vadd.xlane.f32.xlu0 %v360
    %v362 = vpop.xlane.xlu0 %361
    %v363 = vrot.slane %v362, 4
    %v364 = vadd.f32 %v362, %v363
    %v365 = vrot.slane %v364, 2
    %v366 = vadd.f32 %v364, %v365
    %v367 = vrot.slane %v366, 1
    %v368 = vadd.f32 %v366, %v367
    %s369 = vtos %v368
    %370 = vrot.lane.b32.xlu0 %v43, 126
    %v371 = vpop.permute.xlu0 %370
    %372 = vrot.lane.b32.xlu0 %v44, 126
    %v373 = vpop.permute.xlu0 %372
    %374 = vrot.lane.b32.xlu0 %v61, 126
    %v375 = vpop.permute.xlu0 %374
    %376 = vrot.lane.b32.xlu0 %v62, 126
    %v377 = vpop.permute.xlu0 %376
    %378 = vrot.lane.b32.xlu0 %v63, 126
    %v379 = vpop.permute.xlu0 %378
    %380 = vrot.lane.b32.xlu0 %v64, 126
    %v381 = vpop.permute.xlu0 %380
    %382 = vrot.lane.b32.xlu0 %v65, 126
    %v383 = vpop.permute.xlu0 %382
    %384 = vrot.lane.b32.xlu0 %v66, 126
    %v385 = vpop.permute.xlu0 %384
    %386 = vrot.lane.b32.xlu0 %v67, 126
    %v387 = vpop.permute.xlu0 %386
    %388 = vrot.lane.b32.xlu0 %v68, 126
    %v389 = vpop.permute.xlu0 %388
    %390 = vrot.lane.b32.xlu0 %v69, 126
    %v391 = vpop.permute.xlu0 %390
    %392 = vrot.lane.b32.xlu0 %v70, 126
    %v393 = vpop.permute.xlu0 %392
    %394 = vrot.lane.b32.xlu0 %v71, 126
    %v395 = vpop.permute.xlu0 %394
    %396 = vrot.lane.b32.xlu0 %v72, 126
    %v397 = vpop.permute.xlu0 %396
    %398 = vrot.lane.b32.xlu0 %v73, 126
    %v399 = vpop.permute.xlu0 %398
    %400 = vrot.lane.b32.xlu0 %v74, 126
    %v401 = vpop.permute.xlu0 %400
    %402 = vrot.lane.b32.xlu0 %v75, 126
    %v403 = vpop.permute.xlu0 %402
    %404 = vrot.lane.b32.xlu0 %v76, 126
    %v405 = vpop.permute.xlu0 %404
    %v406 = vmul.f32 %v43, %v371
    %v407 = vmul.f32 %v44, %v373
    %v408 = vsub.f32 %v61, %v375
    %v409 = vsub.f32 %v62, %v377
    %v410 = vsub.f32 %v63, %v379
    %v411 = vsub.f32 %v64, %v381
    %v412 = vsub.f32 %v65, %v383
    %v413 = vsub.f32 %v66, %v385
    %v414 = vsub.f32 %v67, %v387
    %v415 = vsub.f32 %v68, %v389
    %v416 = vsub.f32 %v69, %v391
    %v417 = vsub.f32 %v70, %v393
    %v418 = vsub.f32 %v71, %v395
    %v419 = vsub.f32 %v72, %v397
    %v420 = vsub.f32 %v73, %v399
    %v421 = vsub.f32 %v74, %v401
    %v422 = vsub.f32 %v75, %v403
    %v423 = vsub.f32 %v76, %v405
    %v424 = vand.u32 2147483647, %v408
    %v425 = vand.u32 2147483647, %v409
    %v426 = vand.u32 2147483647, %v410
    %v427 = vand.u32 2147483647, %v411
    %v428 = vand.u32 2147483647, %v412
    %v429 = vand.u32 2147483647, %v413
    %v430 = vand.u32 2147483647, %v414
    %v431 = vand.u32 2147483647, %v415
    %v432 = vand.u32 2147483647, %v416
    %v433 = vand.u32 2147483647, %v417
    %v434 = vand.u32 2147483647, %v418
    %v435 = vand.u32 2147483647, %v419
    %v436 = vand.u32 2147483647, %v420
    %v437 = vand.u32 2147483647, %v421
    %v438 = vand.u32 2147483647, %v422
    %v439 = vand.u32 2147483647, %v423
    %v442 = vcombine.high %v406, %v406
    %v444 = vunpack.c.l.s4 1966171168
    %v445 = vunpack.c.0.s8 %v444
    %v446 = vlaneseq
    %v447 = vshrl.u32 %v446, 7
    %v448 = vsub.s32 %v445, %v447
    %v449 = vrot.slane %v406, %v448
    %v451 = vunpack.c.l.s4 1966171168
    %v452 = vunpack.c.0.s8 %v451
    %v453 = vlaneseq
    %v454 = vshrl.u32 %v453, 7
    %v455 = vsub.s32 %v452, %v454
    %v456 = vrot.slane %v442, %v455
    %v457 = vcombine.high %v449, %v449
    %v458 = vcombine.high %v456, %v456
    %v460 = vunpack.c.l.s4 1966171168
    %v461 = vunpack.c.0.s8 %v460
    %v462 = vlaneseq
    %v463 = vshrl.u32 %v462, 7
    %v464 = vsub.s32 %v461, %v463
    %v465 = vrot.slane %v449, %v464
    %v467 = vunpack.c.l.s4 1966171168
    %v468 = vunpack.c.0.s8 %v467
    %v469 = vlaneseq
    %v470 = vshrl.u32 %v469, 7
    %v471 = vsub.s32 %v468, %v470
    %v472 = vrot.slane %v456, %v471
    %v474 = vunpack.c.l.s4 1966171168
    %v475 = vunpack.c.0.s8 %v474
    %v476 = vlaneseq
    %v477 = vshrl.u32 %v476, 7
    %v478 = vsub.s32 %v475, %v477
    %v479 = vrot.slane %v457, %v478
    %v481 = vunpack.c.l.s4 1966171168
    %v482 = vunpack.c.0.s8 %v481
    %v483 = vlaneseq
    %v484 = vshrl.u32 %v483, 7
    %v485 = vsub.s32 %v482, %v484
    %v486 = vrot.slane %v458, %v485
    %v487 = vcombine.high %v465, %v465
    %v488 = vcombine.high %v472, %v472
    %v489 = vcombine.high %v479, %v479
    %v490 = vcombine.high %v486, %v486
    %v491 = vcombine.high %v407, %v407
    %v493 = vunpack.c.l.s4 1966171168
    %v494 = vunpack.c.0.s8 %v493
    %v495 = vlaneseq
    %v496 = vshrl.u32 %v495, 7
    %v497 = vsub.s32 %v494, %v496
    %v498 = vrot.slane %v407, %v497
    %v500 = vunpack.c.l.s4 1966171168
    %v501 = vunpack.c.0.s8 %v500
    %v502 = vlaneseq
    %v503 = vshrl.u32 %v502, 7
    %v504 = vsub.s32 %v501, %v503
    %v505 = vrot.slane %v491, %v504
    %v506 = vcombine.high %v498, %v498
    %v507 = vcombine.high %v505, %v505
    %v509 = vunpack.c.l.s4 1966171168
    %v510 = vunpack.c.0.s8 %v509
    %v511 = vlaneseq
    %v512 = vshrl.u32 %v511, 7
    %v513 = vsub.s32 %v510, %v512
    %v514 = vrot.slane %v498, %v513
    %v516 = vunpack.c.l.s4 1966171168
    %v517 = vunpack.c.0.s8 %v516
    %v518 = vlaneseq
    %v519 = vshrl.u32 %v518, 7
    %v520 = vsub.s32 %v517, %v519
    %v521 = vrot.slane %v505, %v520
    %v523 = vunpack.c.l.s4 1966171168
    %v524 = vunpack.c.0.s8 %v523
    %v525 = vlaneseq
    %v526 = vshrl.u32 %v525, 7
    %v527 = vsub.s32 %v524, %v526
    %v528 = vrot.slane %v506, %v527
    %v530 = vunpack.c.l.s4 1966171168
    %v531 = vunpack.c.0.s8 %v530
    %v532 = vlaneseq
    %v533 = vshrl.u32 %v532, 7
    %v534 = vsub.s32 %v531, %v533
    %v535 = vrot.slane %v507, %v534
    %v536 = vcombine.high %v514, %v514
    %v537 = vcombine.high %v521, %v521
    %v538 = vcombine.high %v528, %v528
    %v539 = vcombine.high %v535, %v535
    %v540 = vlaneseq
    %v541 = vshrl.u32 %v540, 7
    %v542 = vsub.s32 0, %v541
    %v543 = vrot.slane %v465, %v542
    %v544 = vlaneseq
    %v545 = vshrl.u32 %v544, 7
    %v546 = vsub.s32 0, %v545
    %v547 = vrot.slane %v479, %v546
    %v548 = vlaneseq
    %v549 = vshrl.u32 %v548, 7
    %v550 = vsub.s32 0, %v549
    %v551 = vrot.slane %v487, %v550
    %v552 = vlaneseq
    %v553 = vshrl.u32 %v552, 7
    %v554 = vsub.s32 0, %v553
    %v555 = vrot.slane %v489, %v554
    %v556 = vlaneseq
    %v557 = vshrl.u32 %v556, 7
    %v558 = vsub.s32 0, %v557
    %v559 = vrot.slane %v472, %v558
    %v560 = vlaneseq
    %v561 = vshrl.u32 %v560, 7
    %v562 = vsub.s32 0, %v561
    %v563 = vrot.slane %v486, %v562
    %v564 = vlaneseq
    %v565 = vshrl.u32 %v564, 7
    %v566 = vsub.s32 0, %v565
    %v567 = vrot.slane %v488, %v566
    %v568 = vlaneseq
    %v569 = vshrl.u32 %v568, 7
    %v570 = vsub.s32 0, %v569
    %v571 = vrot.slane %v490, %v570
    %v572 = vlaneseq
    %v573 = vshrl.u32 %v572, 7
    %v574 = vsub.s32 0, %v573
    %v575 = vrot.slane %v514, %v574
    %v576 = vlaneseq
    %v577 = vshrl.u32 %v576, 7
    %v578 = vsub.s32 0, %v577
    %v579 = vrot.slane %v528, %v578
    %v580 = vlaneseq
    %v581 = vshrl.u32 %v580, 7
    %v582 = vsub.s32 0, %v581
    %v583 = vrot.slane %v536, %v582
    %v584 = vlaneseq
    %v585 = vshrl.u32 %v584, 7
    %v586 = vsub.s32 0, %v585
    %v587 = vrot.slane %v538, %v586
    %v588 = vlaneseq
    %v589 = vshrl.u32 %v588, 7
    %v590 = vsub.s32 0, %v589
    %v591 = vrot.slane %v521, %v590
    %v592 = vlaneseq
    %v593 = vshrl.u32 %v592, 7
    %v594 = vsub.s32 0, %v593
    %v595 = vrot.slane %v535, %v594
    %v596 = vlaneseq
    %v597 = vshrl.u32 %v596, 7
    %v598 = vsub.s32 0, %v597
    %v599 = vrot.slane %v537, %v598
    %v600 = vlaneseq
    %v601 = vshrl.u32 %v600, 7
    %v602 = vsub.s32 0, %v601
    %v603 = vrot.slane %v539, %v602
    %v620 = vmul.f32 %v424, %v543
    %v621 = vmul.f32 %v425, %v547
    %v622 = vmul.f32 %v426, %v551
    %v623 = vmul.f32 %v427, %v555
    %v624 = vmul.f32 %v428, %v559
    %v625 = vmul.f32 %v429, %v563
    %v626 = vmul.f32 %v430, %v567
    %v627 = vmul.f32 %v431, %v571
    %v628 = vmul.f32 %v432, %v575
    %v629 = vmul.f32 %v433, %v579
    %v630 = vmul.f32 %v434, %v583
    %v631 = vmul.f32 %v435, %v587
    %v632 = vmul.f32 %v436, %v591
    %v633 = vmul.f32 %v437, %v595
    %v634 = vmul.f32 %v438, %v599
    %v635 = vmul.f32 %v439, %v603
    %v636 = vadd.f32 %v620, %v621
    %v637 = vadd.f32 %v636, %v622
    %v638 = vadd.f32 %v637, %v623
    %v639 = vadd.f32 %v638, %v624
    %v640 = vadd.f32 %v639, %v625
    %v641 = vadd.f32 %v640, %v626
    %v642 = vadd.f32 %v641, %v627
    %v643 = vadd.f32 %v642, %v628
    %v644 = vadd.f32 %v643, %v629
    %v645 = vadd.f32 %v644, %v630
    %v646 = vadd.f32 %v645, %v631
    %v647 = vadd.f32 %v646, %v632
    %v648 = vadd.f32 %v647, %v633
    %v649 = vadd.f32 %v648, %v634
    %v650 = vadd.f32 %v649, %v635
    %651 = vadd.xlane.f32.xlu0 %v650
    %v652 = vpop.xlane.xlu0 %651
    %v653 = vadd.f32 %v406, %v407
    %654 = vadd.xlane.f32.xlu0 %v653
    %v655 = vpop.xlane.xlu0 %654
    %v656 = vrot.slane %v655, 4
    %v657 = vadd.f32 %v655, %v656
    %v658 = vrot.slane %v657, 2
    %v659 = vadd.f32 %v657, %v658
    %v660 = vrot.slane %v659, 1
    %v661 = vadd.f32 %v659, %v660
    %s662 = vtos %v661
    %663 = vrot.lane.b32.xlu0 %v43, 127
    %v664 = vpop.permute.xlu0 %663
    %665 = vrot.lane.b32.xlu0 %v44, 127
    %v666 = vpop.permute.xlu0 %665
    %667 = vrot.lane.b32.xlu0 %v61, 127
    %v668 = vpop.permute.xlu0 %667
    %669 = vrot.lane.b32.xlu0 %v62, 127
    %v670 = vpop.permute.xlu0 %669
    %671 = vrot.lane.b32.xlu0 %v63, 127
    %v672 = vpop.permute.xlu0 %671
    %673 = vrot.lane.b32.xlu0 %v64, 127
    %v674 = vpop.permute.xlu0 %673
    %675 = vrot.lane.b32.xlu0 %v65, 127
    %v676 = vpop.permute.xlu0 %675
    %677 = vrot.lane.b32.xlu0 %v66, 127
    %v678 = vpop.permute.xlu0 %677
    %679 = vrot.lane.b32.xlu0 %v67, 127
    %v680 = vpop.permute.xlu0 %679
    %681 = vrot.lane.b32.xlu0 %v68, 127
    %v682 = vpop.permute.xlu0 %681
    %683 = vrot.lane.b32.xlu0 %v69, 127
    %v684 = vpop.permute.xlu0 %683
    %685 = vrot.lane.b32.xlu0 %v70, 127
    %v686 = vpop.permute.xlu0 %685
    %687 = vrot.lane.b32.xlu0 %v71, 127
    %v688 = vpop.permute.xlu0 %687
    %689 = vrot.lane.b32.xlu0 %v72, 127
    %v690 = vpop.permute.xlu0 %689
    %691 = vrot.lane.b32.xlu0 %v73, 127
    %v692 = vpop.permute.xlu0 %691
    %693 = vrot.lane.b32.xlu0 %v74, 127
    %v694 = vpop.permute.xlu0 %693
    %695 = vrot.lane.b32.xlu0 %v75, 127
    %v696 = vpop.permute.xlu0 %695
    %697 = vrot.lane.b32.xlu0 %v76, 127
    %v698 = vpop.permute.xlu0 %697
    %v699 = vmul.f32 %v43, %v664
    %v700 = vmul.f32 %v44, %v666
    %v701 = vsub.f32 %v61, %v668
    %v702 = vsub.f32 %v62, %v670
    %v703 = vsub.f32 %v63, %v672
    %v704 = vsub.f32 %v64, %v674
    %v705 = vsub.f32 %v65, %v676
    %v706 = vsub.f32 %v66, %v678
    %v707 = vsub.f32 %v67, %v680
    %v708 = vsub.f32 %v68, %v682
    %v709 = vsub.f32 %v69, %v684
    %v710 = vsub.f32 %v70, %v686
    %v711 = vsub.f32 %v71, %v688
    %v712 = vsub.f32 %v72, %v690
    %v713 = vsub.f32 %v73, %v692
    %v714 = vsub.f32 %v74, %v694
    %v715 = vsub.f32 %v75, %v696
    %v716 = vsub.f32 %v76, %v698
    %v717 = vand.u32 2147483647, %v701
    %v718 = vand.u32 2147483647, %v702
    %v719 = vand.u32 2147483647, %v703
    %v720 = vand.u32 2147483647, %v704
    %v721 = vand.u32 2147483647, %v705
    %v722 = vand.u32 2147483647, %v706
    %v723 = vand.u32 2147483647, %v707
    %v724 = vand.u32 2147483647, %v708
    %v725 = vand.u32 2147483647, %v709
    %v726 = vand.u32 2147483647, %v710
    %v727 = vand.u32 2147483647, %v711
    %v728 = vand.u32 2147483647, %v712
    %v729 = vand.u32 2147483647, %v713
    %v730 = vand.u32 2147483647, %v714
    %v731 = vand.u32 2147483647, %v715
    %v732 = vand.u32 2147483647, %v716
    %v735 = vcombine.high %v699, %v699
    %v737 = vunpack.c.l.s4 1966171168
    %v738 = vunpack.c.0.s8 %v737
    %v739 = vlaneseq
    %v740 = vshrl.u32 %v739, 7
    %v741 = vsub.s32 %v738, %v740
    %v742 = vrot.slane %v699, %v741
    %v744 = vunpack.c.l.s4 1966171168
    %v745 = vunpack.c.0.s8 %v744
    %v746 = vlaneseq
    %v747 = vshrl.u32 %v746, 7
    %v748 = vsub.s32 %v745, %v747
    %v749 = vrot.slane %v735, %v748
    %v750 = vcombine.high %v742, %v742
    %v751 = vcombine.high %v749, %v749
    %v753 = vunpack.c.l.s4 1966171168
    %v754 = vunpack.c.0.s8 %v753
    %v755 = vlaneseq
    %v756 = vshrl.u32 %v755, 7
    %v757 = vsub.s32 %v754, %v756
    %v758 = vrot.slane %v742, %v757
    %v760 = vunpack.c.l.s4 1966171168
    %v761 = vunpack.c.0.s8 %v760
    %v762 = vlaneseq
    %v763 = vshrl.u32 %v762, 7
    %v764 = vsub.s32 %v761, %v763
    %v765 = vrot.slane %v749, %v764
    %v767 = vunpack.c.l.s4 1966171168
    %v768 = vunpack.c.0.s8 %v767
    %v769 = vlaneseq
    %v770 = vshrl.u32 %v769, 7
    %v771 = vsub.s32 %v768, %v770
    %v772 = vrot.slane %v750, %v771
    %v774 = vunpack.c.l.s4 1966171168
    %v775 = vunpack.c.0.s8 %v774
    %v776 = vlaneseq
    %v777 = vshrl.u32 %v776, 7
    %v778 = vsub.s32 %v775, %v777
    %v779 = vrot.slane %v751, %v778
    %v780 = vcombine.high %v758, %v758
    %v781 = vcombine.high %v765, %v765
    %v782 = vcombine.high %v772, %v772
    %v783 = vcombine.high %v779, %v779
    %v784 = vcombine.high %v700, %v700
    %v786 = vunpack.c.l.s4 1966171168
    %v787 = vunpack.c.0.s8 %v786
    %v788 = vlaneseq
    %v789 = vshrl.u32 %v788, 7
    %v790 = vsub.s32 %v787, %v789
    %v791 = vrot.slane %v700, %v790
    %v793 = vunpack.c.l.s4 1966171168
    %v794 = vunpack.c.0.s8 %v793
    %v795 = vlaneseq
    %v796 = vshrl.u32 %v795, 7
    %v797 = vsub.s32 %v794, %v796
    %v798 = vrot.slane %v784, %v797
    %v799 = vcombine.high %v791, %v791
    %v800 = vcombine.high %v798, %v798
    %v802 = vunpack.c.l.s4 1966171168
    %v803 = vunpack.c.0.s8 %v802
    %v804 = vlaneseq
    %v805 = vshrl.u32 %v804, 7
    %v806 = vsub.s32 %v803, %v805
    %v807 = vrot.slane %v791, %v806
    %v809 = vunpack.c.l.s4 1966171168
    %v810 = vunpack.c.0.s8 %v809
    %v811 = vlaneseq
    %v812 = vshrl.u32 %v811, 7
    %v813 = vsub.s32 %v810, %v812
    %v814 = vrot.slane %v798, %v813
    %v816 = vunpack.c.l.s4 1966171168
    %v817 = vunpack.c.0.s8 %v816
    %v818 = vlaneseq
    %v819 = vshrl.u32 %v818, 7
    %v820 = vsub.s32 %v817, %v819
    %v821 = vrot.slane %v799, %v820
    %v823 = vunpack.c.l.s4 1966171168
    %v824 = vunpack.c.0.s8 %v823
    %v825 = vlaneseq
    %v826 = vshrl.u32 %v825, 7
    %v827 = vsub.s32 %v824, %v826
    %v828 = vrot.slane %v800, %v827
    %v829 = vcombine.high %v807, %v807
    %v830 = vcombine.high %v814, %v814
    %v831 = vcombine.high %v821, %v821
    %v832 = vcombine.high %v828, %v828
    %v833 = vlaneseq
    %v834 = vshrl.u32 %v833, 7
    %v835 = vsub.s32 0, %v834
    %v836 = vrot.slane %v758, %v835
    %v837 = vlaneseq
    %v838 = vshrl.u32 %v837, 7
    %v839 = vsub.s32 0, %v838
    %v840 = vrot.slane %v772, %v839
    %v841 = vlaneseq
    %v842 = vshrl.u32 %v841, 7
    %v843 = vsub.s32 0, %v842
    %v844 = vrot.slane %v780, %v843
    %v845 = vlaneseq
    %v846 = vshrl.u32 %v845, 7
    %v847 = vsub.s32 0, %v846
    %v848 = vrot.slane %v782, %v847
    %v849 = vlaneseq
    %v850 = vshrl.u32 %v849, 7
    %v851 = vsub.s32 0, %v850
    %v852 = vrot.slane %v765, %v851
    %v853 = vlaneseq
    %v854 = vshrl.u32 %v853, 7
    %v855 = vsub.s32 0, %v854
    %v856 = vrot.slane %v779, %v855
    %v857 = vlaneseq
    %v858 = vshrl.u32 %v857, 7
    %v859 = vsub.s32 0, %v858
    %v860 = vrot.slane %v781, %v859
    %v861 = vlaneseq
    %v862 = vshrl.u32 %v861, 7
    %v863 = vsub.s32 0, %v862
    %v864 = vrot.slane %v783, %v863
    %v865 = vlaneseq
    %v866 = vshrl.u32 %v865, 7
    %v867 = vsub.s32 0, %v866
    %v868 = vrot.slane %v807, %v867
    %v869 = vlaneseq
    %v870 = vshrl.u32 %v869, 7
    %v871 = vsub.s32 0, %v870
    %v872 = vrot.slane %v821, %v871
    %v873 = vlaneseq
    %v874 = vshrl.u32 %v873, 7
    %v875 = vsub.s32 0, %v874
    %v876 = vrot.slane %v829, %v875
    %v877 = vlaneseq
    %v878 = vshrl.u32 %v877, 7
    %v879 = vsub.s32 0, %v878
    %v880 = vrot.slane %v831, %v879
    %v881 = vlaneseq
    %v882 = vshrl.u32 %v881, 7
    %v883 = vsub.s32 0, %v882
    %v884 = vrot.slane %v814, %v883
    %v885 = vlaneseq
    %v886 = vshrl.u32 %v885, 7
    %v887 = vsub.s32 0, %v886
    %v888 = vrot.slane %v828, %v887
    %v889 = vlaneseq
    %v890 = vshrl.u32 %v889, 7
    %v891 = vsub.s32 0, %v890
    %v892 = vrot.slane %v830, %v891
    %v893 = vlaneseq
    %v894 = vshrl.u32 %v893, 7
    %v895 = vsub.s32 0, %v894
    %v896 = vrot.slane %v832, %v895
    %v913 = vmul.f32 %v717, %v836
    %v914 = vmul.f32 %v718, %v840
    %v915 = vmul.f32 %v719, %v844
    %v916 = vmul.f32 %v720, %v848
    %v917 = vmul.f32 %v721, %v852
    %v918 = vmul.f32 %v722, %v856
    %v919 = vmul.f32 %v723, %v860
    %v920 = vmul.f32 %v724, %v864
    %v921 = vmul.f32 %v725, %v868
    %v922 = vmul.f32 %v726, %v872
    %v923 = vmul.f32 %v727, %v876
    %v924 = vmul.f32 %v728, %v880
    %v925 = vmul.f32 %v729, %v884
    %v926 = vmul.f32 %v730, %v888
    %v927 = vmul.f32 %v731, %v892
    %v928 = vmul.f32 %v732, %v896
    %v929 = vadd.f32 %v913, %v914
    %v930 = vadd.f32 %v929, %v915
    %v931 = vadd.f32 %v930, %v916
    %v932 = vadd.f32 %v931, %v917
    %v933 = vadd.f32 %v932, %v918
    %v934 = vadd.f32 %v933, %v919
    %v935 = vadd.f32 %v934, %v920
    %v936 = vadd.f32 %v935, %v921
    %v937 = vadd.f32 %v936, %v922
    %v938 = vadd.f32 %v937, %v923
    %v939 = vadd.f32 %v938, %v924
    %v940 = vadd.f32 %v939, %v925
    %v941 = vadd.f32 %v940, %v926
    %v942 = vadd.f32 %v941, %v927
    %v943 = vadd.f32 %v942, %v928
    %944 = vadd.xlane.f32.xlu0 %v943
    %v945 = vpop.xlane.xlu0 %944
    %v946 = vadd.f32 %v699, %v700
    %947 = vadd.xlane.f32.xlu0 %v946
    %v948 = vpop.xlane.xlu0 %947
    %v949 = vrot.slane %v948, 4
    %v950 = vadd.f32 %v948, %v949
    %v951 = vrot.slane %v950, 2
    %v952 = vadd.f32 %v950, %v951
    %v953 = vrot.slane %v952, 1
    %v954 = vadd.f32 %v952, %v953
    %s955 = vtos %v954
    %v956 = vmul.f32 %v43, %v43
    %v957 = vmul.f32 %v44, %v44
    %v958 = vsub.f32 %v61, %v61
    %v959 = vsub.f32 %v62, %v62
    %v960 = vsub.f32 %v63, %v63
    %v961 = vsub.f32 %v64, %v64
    %v962 = vsub.f32 %v65, %v65
    %v963 = vsub.f32 %v66, %v66
    %v964 = vsub.f32 %v67, %v67
    %v965 = vsub.f32 %v68, %v68
    %v966 = vsub.f32 %v69, %v69
    %v967 = vsub.f32 %v70, %v70
    %v968 = vsub.f32 %v71, %v71
    %v969 = vsub.f32 %v72, %v72
    %v970 = vsub.f32 %v73, %v73
    %v971 = vsub.f32 %v74, %v74
    %v972 = vsub.f32 %v75, %v75
    %v973 = vsub.f32 %v76, %v76
    %v974 = vand.u32 2147483647, %v958
    %v975 = vand.u32 2147483647, %v959
    %v976 = vand.u32 2147483647, %v960
    %v977 = vand.u32 2147483647, %v961
    %v978 = vand.u32 2147483647, %v962
    %v979 = vand.u32 2147483647, %v963
    %v980 = vand.u32 2147483647, %v964
    %v981 = vand.u32 2147483647, %v965
    %v982 = vand.u32 2147483647, %v966
    %v983 = vand.u32 2147483647, %v967
    %v984 = vand.u32 2147483647, %v968
    %v985 = vand.u32 2147483647, %v969
    %v986 = vand.u32 2147483647, %v970
    %v987 = vand.u32 2147483647, %v971
    %v988 = vand.u32 2147483647, %v972
    %v989 = vand.u32 2147483647, %v973
    %v992 = vcombine.high %v956, %v956
    %v994 = vunpack.c.l.s4 1966171168
    %v995 = vunpack.c.0.s8 %v994
    %v996 = vlaneseq
    %v997 = vshrl.u32 %v996, 7
    %v998 = vsub.s32 %v995, %v997
    %v999 = vrot.slane %v956, %v998
    %v1001 = vunpack.c.l.s4 1966171168
    %v1002 = vunpack.c.0.s8 %v1001
    %v1003 = vlaneseq
    %v1004 = vshrl.u32 %v1003, 7
    %v1005 = vsub.s32 %v1002, %v1004
    %v1006 = vrot.slane %v992, %v1005
    %v1007 = vcombine.high %v999, %v999
    %v1008 = vcombine.high %v1006, %v1006
    %v1010 = vunpack.c.l.s4 1966171168
    %v1011 = vunpack.c.0.s8 %v1010
    %v1012 = vlaneseq
    %v1013 = vshrl.u32 %v1012, 7
    %v1014 = vsub.s32 %v1011, %v1013
    %v1015 = vrot.slane %v999, %v1014
    %v1017 = vunpack.c.l.s4 1966171168
    %v1018 = vunpack.c.0.s8 %v1017
    %v1019 = vlaneseq
    %v1020 = vshrl.u32 %v1019, 7
    %v1021 = vsub.s32 %v1018, %v1020
    %v1022 = vrot.slane %v1006, %v1021
    %v1024 = vunpack.c.l.s4 1966171168
    %v1025 = vunpack.c.0.s8 %v1024
    %v1026 = vlaneseq
    %v1027 = vshrl.u32 %v1026, 7
    %v1028 = vsub.s32 %v1025, %v1027
    %v1029 = vrot.slane %v1007, %v1028
    %v1031 = vunpack.c.l.s4 1966171168
    %v1032 = vunpack.c.0.s8 %v1031
    %v1033 = vlaneseq
    %v1034 = vshrl.u32 %v1033, 7
    %v1035 = vsub.s32 %v1032, %v1034
    %v1036 = vrot.slane %v1008, %v1035
    %v1037 = vcombine.high %v1015, %v1015
    %v1038 = vcombine.high %v1022, %v1022
    %v1039 = vcombine.high %v1029, %v1029
    %v1040 = vcombine.high %v1036, %v1036
    %v1041 = vcombine.high %v957, %v957
    %v1043 = vunpack.c.l.s4 1966171168
    %v1044 = vunpack.c.0.s8 %v1043
    %v1045 = vlaneseq
    %v1046 = vshrl.u32 %v1045, 7
    %v1047 = vsub.s32 %v1044, %v1046
    %v1048 = vrot.slane %v957, %v1047
    %v1050 = vunpack.c.l.s4 1966171168
    %v1051 = vunpack.c.0.s8 %v1050
    %v1052 = vlaneseq
    %v1053 = vshrl.u32 %v1052, 7
    %v1054 = vsub.s32 %v1051, %v1053
    %v1055 = vrot.slane %v1041, %v1054
    %v1056 = vcombine.high %v1048, %v1048
    %v1057 = vcombine.high %v1055, %v1055
    %v1059 = vunpack.c.l.s4 1966171168
    %v1060 = vunpack.c.0.s8 %v1059
    %v1061 = vlaneseq
    %v1062 = vshrl.u32 %v1061, 7
    %v1063 = vsub.s32 %v1060, %v1062
    %v1064 = vrot.slane %v1048, %v1063
    %v1066 = vunpack.c.l.s4 1966171168
    %v1067 = vunpack.c.0.s8 %v1066
    %v1068 = vlaneseq
    %v1069 = vshrl.u32 %v1068, 7
    %v1070 = vsub.s32 %v1067, %v1069
    %v1071 = vrot.slane %v1055, %v1070
    %v1073 = vunpack.c.l.s4 1966171168
    %v1074 = vunpack.c.0.s8 %v1073
    %v1075 = vlaneseq
    %v1076 = vshrl.u32 %v1075, 7
    %v1077 = vsub.s32 %v1074, %v1076
    %v1078 = vrot.slane %v1056, %v1077
    %v1080 = vunpack.c.l.s4 1966171168
    %v1081 = vunpack.c.0.s8 %v1080
    %v1082 = vlaneseq
    %v1083 = vshrl.u32 %v1082, 7
    %v1084 = vsub.s32 %v1081, %v1083
    %v1085 = vrot.slane %v1057, %v1084
    %v1086 = vcombine.high %v1064, %v1064
    %v1087 = vcombine.high %v1071, %v1071
    %v1088 = vcombine.high %v1078, %v1078
    %v1089 = vcombine.high %v1085, %v1085
    %v1090 = vlaneseq
    %v1091 = vshrl.u32 %v1090, 7
    %v1092 = vsub.s32 0, %v1091
    %v1093 = vrot.slane %v1015, %v1092
    %v1094 = vlaneseq
    %v1095 = vshrl.u32 %v1094, 7
    %v1096 = vsub.s32 0, %v1095
    %v1097 = vrot.slane %v1029, %v1096
    %v1098 = vlaneseq
    %v1099 = vshrl.u32 %v1098, 7
    %v1100 = vsub.s32 0, %v1099
    %v1101 = vrot.slane %v1037, %v1100
    %v1102 = vlaneseq
    %v1103 = vshrl.u32 %v1102, 7
    %v1104 = vsub.s32 0, %v1103
    %v1105 = vrot.slane %v1039, %v1104
    %v1106 = vlaneseq
    %v1107 = vshrl.u32 %v1106, 7
    %v1108 = vsub.s32 0, %v1107
    %v1109 = vrot.slane %v1022, %v1108
    %v1110 = vlaneseq
    %v1111 = vshrl.u32 %v1110, 7
    %v1112 = vsub.s32 0, %v1111
    %v1113 = vrot.slane %v1036, %v1112
    %v1114 = vlaneseq
    %v1115 = vshrl.u32 %v1114, 7
    %v1116 = vsub.s32 0, %v1115
    %v1117 = vrot.slane %v1038, %v1116
    %v1118 = vlaneseq
    %v1119 = vshrl.u32 %v1118, 7
    %v1120 = vsub.s32 0, %v1119
    %v1121 = vrot.slane %v1040, %v1120
    %v1122 = vlaneseq
    %v1123 = vshrl.u32 %v1122, 7
    %v1124 = vsub.s32 0, %v1123
    %v1125 = vrot.slane %v1064, %v1124
    %v1126 = vlaneseq
    %v1127 = vshrl.u32 %v1126, 7
    %v1128 = vsub.s32 0, %v1127
    %v1129 = vrot.slane %v1078, %v1128
    %v1130 = vlaneseq
    %v1131 = vshrl.u32 %v1130, 7
    %v1132 = vsub.s32 0, %v1131
    %v1133 = vrot.slane %v1086, %v1132
    %v1134 = vlaneseq
    %v1135 = vshrl.u32 %v1134, 7
    %v1136 = vsub.s32 0, %v1135
    %v1137 = vrot.slane %v1088, %v1136
    %v1138 = vlaneseq
    %v1139 = vshrl.u32 %v1138, 7
    %v1140 = vsub.s32 0, %v1139
    %v1141 = vrot.slane %v1071, %v1140
    %v1142 = vlaneseq
    %v1143 = vshrl.u32 %v1142, 7
    %v1144 = vsub.s32 0, %v1143
    %v1145 = vrot.slane %v1085, %v1144
    %v1146 = vlaneseq
    %v1147 = vshrl.u32 %v1146, 7
    %v1148 = vsub.s32 0, %v1147
    %v1149 = vrot.slane %v1087, %v1148
    %v1150 = vlaneseq
    %v1151 = vshrl.u32 %v1150, 7
    %v1152 = vsub.s32 0, %v1151
    %v1153 = vrot.slane %v1089, %v1152
    %v1170 = vmul.f32 %v974, %v1093
    %v1171 = vmul.f32 %v975, %v1097
    %v1172 = vmul.f32 %v976, %v1101
    %v1173 = vmul.f32 %v977, %v1105
    %v1174 = vmul.f32 %v978, %v1109
    %v1175 = vmul.f32 %v979, %v1113
    %v1176 = vmul.f32 %v980, %v1117
    %v1177 = vmul.f32 %v981, %v1121
    %v1178 = vmul.f32 %v982, %v1125
    %v1179 = vmul.f32 %v983, %v1129
    %v1180 = vmul.f32 %v984, %v1133
    %v1181 = vmul.f32 %v985, %v1137
    %v1182 = vmul.f32 %v986, %v1141
    %v1183 = vmul.f32 %v987, %v1145
    %v1184 = vmul.f32 %v988, %v1149
    %v1185 = vmul.f32 %v989, %v1153
    %v1186 = vadd.f32 %v1170, %v1171
    %v1187 = vadd.f32 %v1186, %v1172
    %v1188 = vadd.f32 %v1187, %v1173
    %v1189 = vadd.f32 %v1188, %v1174
    %v1190 = vadd.f32 %v1189, %v1175
    %v1191 = vadd.f32 %v1190, %v1176
    %v1192 = vadd.f32 %v1191, %v1177
    %v1193 = vadd.f32 %v1192, %v1178
    %v1194 = vadd.f32 %v1193, %v1179
    %v1195 = vadd.f32 %v1194, %v1180
    %v1196 = vadd.f32 %v1195, %v1181
    %v1197 = vadd.f32 %v1196, %v1182
    %v1198 = vadd.f32 %v1197, %v1183
    %v1199 = vadd.f32 %v1198, %v1184
    %v1200 = vadd.f32 %v1199, %v1185
    %1201 = vadd.xlane.f32.xlu0 %v1200
    %v1202 = vpop.xlane.xlu0 %1201
    %v1203 = vadd.f32 %v956, %v957
    %1204 = vadd.xlane.f32.xlu0 %v1203
    %v1205 = vpop.xlane.xlu0 %1204
    %v1206 = vrot.slane %v1205, 4
    %v1207 = vadd.f32 %v1205, %v1206
    %v1208 = vrot.slane %v1207, 2
    %v1209 = vadd.f32 %v1207, %v1208
    %v1210 = vrot.slane %v1209, 1
    %v1211 = vadd.f32 %v1209, %v1210
    %s1212 = vtos %v1211
    %1213 = vrot.lane.b32.xlu0 %v43, 1
    %v1214 = vpop.permute.xlu0 %1213
    %1215 = vrot.lane.b32.xlu0 %v44, 1
    %v1216 = vpop.permute.xlu0 %1215
    %1217 = vrot.lane.b32.xlu0 %v61, 1
    %v1218 = vpop.permute.xlu0 %1217
    %1219 = vrot.lane.b32.xlu0 %v62, 1
    %v1220 = vpop.permute.xlu0 %1219
    %1221 = vrot.lane.b32.xlu0 %v63, 1
    %v1222 = vpop.permute.xlu0 %1221
    %1223 = vrot.lane.b32.xlu0 %v64, 1
    %v1224 = vpop.permute.xlu0 %1223
    %1225 = vrot.lane.b32.xlu0 %v65, 1
    %v1226 = vpop.permute.xlu0 %1225
    %1227 = vrot.lane.b32.xlu0 %v66, 1
    %v1228 = vpop.permute.xlu0 %1227
    %1229 = vrot.lane.b32.xlu0 %v67, 1
    %v1230 = vpop.permute.xlu0 %1229
    %1231 = vrot.lane.b32.xlu0 %v68, 1
    %v1232 = vpop.permute.xlu0 %1231
    %1233 = vrot.lane.b32.xlu0 %v69, 1
    %v1234 = vpop.permute.xlu0 %1233
    %1235 = vrot.lane.b32.xlu0 %v70, 1
    %v1236 = vpop.permute.xlu0 %1235
    %1237 = vrot.lane.b32.xlu0 %v71, 1
    %v1238 = vpop.permute.xlu0 %1237
    %1239 = vrot.lane.b32.xlu0 %v72, 1
    %v1240 = vpop.permute.xlu0 %1239
    %1241 = vrot.lane.b32.xlu0 %v73, 1
    %v1242 = vpop.permute.xlu0 %1241
    %1243 = vrot.lane.b32.xlu0 %v74, 1
    %v1244 = vpop.permute.xlu0 %1243
    %1245 = vrot.lane.b32.xlu0 %v75, 1
    %v1246 = vpop.permute.xlu0 %1245
    %1247 = vrot.lane.b32.xlu0 %v76, 1
    %v1248 = vpop.permute.xlu0 %1247
    %v1249 = vmul.f32 %v43, %v1214
    %v1250 = vmul.f32 %v44, %v1216
    %v1251 = vsub.f32 %v61, %v1218
    %v1252 = vsub.f32 %v62, %v1220
    %v1253 = vsub.f32 %v63, %v1222
    %v1254 = vsub.f32 %v64, %v1224
    %v1255 = vsub.f32 %v65, %v1226
    %v1256 = vsub.f32 %v66, %v1228
    %v1257 = vsub.f32 %v67, %v1230
    %v1258 = vsub.f32 %v68, %v1232
    %v1259 = vsub.f32 %v69, %v1234
    %v1260 = vsub.f32 %v70, %v1236
    %v1261 = vsub.f32 %v71, %v1238
    %v1262 = vsub.f32 %v72, %v1240
    %v1263 = vsub.f32 %v73, %v1242
    %v1264 = vsub.f32 %v74, %v1244
    %v1265 = vsub.f32 %v75, %v1246
    %v1266 = vsub.f32 %v76, %v1248
    %v1267 = vand.u32 2147483647, %v1251
    %v1268 = vand.u32 2147483647, %v1252
    %v1269 = vand.u32 2147483647, %v1253
    %v1270 = vand.u32 2147483647, %v1254
    %v1271 = vand.u32 2147483647, %v1255
    %v1272 = vand.u32 2147483647, %v1256
    %v1273 = vand.u32 2147483647, %v1257
    %v1274 = vand.u32 2147483647, %v1258
    %v1275 = vand.u32 2147483647, %v1259
    %v1276 = vand.u32 2147483647, %v1260
    %v1277 = vand.u32 2147483647, %v1261
    %v1278 = vand.u32 2147483647, %v1262
    %v1279 = vand.u32 2147483647, %v1263
    %v1280 = vand.u32 2147483647, %v1264
    %v1281 = vand.u32 2147483647, %v1265
    %v1282 = vand.u32 2147483647, %v1266
    %v1285 = vcombine.high %v1249, %v1249
    %v1287 = vunpack.c.l.s4 1966171168
    %v1288 = vunpack.c.0.s8 %v1287
    %v1289 = vlaneseq
    %v1290 = vshrl.u32 %v1289, 7
    %v1291 = vsub.s32 %v1288, %v1290
    %v1292 = vrot.slane %v1249, %v1291
    %v1294 = vunpack.c.l.s4 1966171168
    %v1295 = vunpack.c.0.s8 %v1294
    %v1296 = vlaneseq
    %v1297 = vshrl.u32 %v1296, 7
    %v1298 = vsub.s32 %v1295, %v1297
    %v1299 = vrot.slane %v1285, %v1298
    %v1300 = vcombine.high %v1292, %v1292
    %v1301 = vcombine.high %v1299, %v1299
    %v1303 = vunpack.c.l.s4 1966171168
    %v1304 = vunpack.c.0.s8 %v1303
    %v1305 = vlaneseq
    %v1306 = vshrl.u32 %v1305, 7
    %v1307 = vsub.s32 %v1304, %v1306
    %v1308 = vrot.slane %v1292, %v1307
    %v1310 = vunpack.c.l.s4 1966171168
    %v1311 = vunpack.c.0.s8 %v1310
    %v1312 = vlaneseq
    %v1313 = vshrl.u32 %v1312, 7
    %v1314 = vsub.s32 %v1311, %v1313
    %v1315 = vrot.slane %v1299, %v1314
    %v1317 = vunpack.c.l.s4 1966171168
    %v1318 = vunpack.c.0.s8 %v1317
    %v1319 = vlaneseq
    %v1320 = vshrl.u32 %v1319, 7
    %v1321 = vsub.s32 %v1318, %v1320
    %v1322 = vrot.slane %v1300, %v1321
    %v1324 = vunpack.c.l.s4 1966171168
    %v1325 = vunpack.c.0.s8 %v1324
    %v1326 = vlaneseq
    %v1327 = vshrl.u32 %v1326, 7
    %v1328 = vsub.s32 %v1325, %v1327
    %v1329 = vrot.slane %v1301, %v1328
    %v1330 = vcombine.high %v1308, %v1308
    %v1331 = vcombine.high %v1315, %v1315
    %v1332 = vcombine.high %v1322, %v1322
    %v1333 = vcombine.high %v1329, %v1329
    %v1334 = vcombine.high %v1250, %v1250
    %v1336 = vunpack.c.l.s4 1966171168
    %v1337 = vunpack.c.0.s8 %v1336
    %v1338 = vlaneseq
    %v1339 = vshrl.u32 %v1338, 7
    %v1340 = vsub.s32 %v1337, %v1339
    %v1341 = vrot.slane %v1250, %v1340
    %v1343 = vunpack.c.l.s4 1966171168
    %v1344 = vunpack.c.0.s8 %v1343
    %v1345 = vlaneseq
    %v1346 = vshrl.u32 %v1345, 7
    %v1347 = vsub.s32 %v1344, %v1346
    %v1348 = vrot.slane %v1334, %v1347
    %v1349 = vcombine.high %v1341, %v1341
    %v1350 = vcombine.high %v1348, %v1348
    %v1352 = vunpack.c.l.s4 1966171168
    %v1353 = vunpack.c.0.s8 %v1352
    %v1354 = vlaneseq
    %v1355 = vshrl.u32 %v1354, 7
    %v1356 = vsub.s32 %v1353, %v1355
    %v1357 = vrot.slane %v1341, %v1356
    %v1359 = vunpack.c.l.s4 1966171168
    %v1360 = vunpack.c.0.s8 %v1359
    %v1361 = vlaneseq
    %v1362 = vshrl.u32 %v1361, 7
    %v1363 = vsub.s32 %v1360, %v1362
    %v1364 = vrot.slane %v1348, %v1363
    %v1366 = vunpack.c.l.s4 1966171168
    %v1367 = vunpack.c.0.s8 %v1366
    %v1368 = vlaneseq
    %v1369 = vshrl.u32 %v1368, 7
    %v1370 = vsub.s32 %v1367, %v1369
    %v1371 = vrot.slane %v1349, %v1370
    %v1373 = vunpack.c.l.s4 1966171168
    %v1374 = vunpack.c.0.s8 %v1373
    %v1375 = vlaneseq
    %v1376 = vshrl.u32 %v1375, 7
    %v1377 = vsub.s32 %v1374, %v1376
    %v1378 = vrot.slane %v1350, %v1377
    %v1379 = vcombine.high %v1357, %v1357
    %v1380 = vcombine.high %v1364, %v1364
    %v1381 = vcombine.high %v1371, %v1371
    %v1382 = vcombine.high %v1378, %v1378
    %v1383 = vlaneseq
    %v1384 = vshrl.u32 %v1383, 7
    %v1385 = vsub.s32 0, %v1384
    %v1386 = vrot.slane %v1308, %v1385
    %v1387 = vlaneseq
    %v1388 = vshrl.u32 %v1387, 7
    %v1389 = vsub.s32 0, %v1388
    %v1390 = vrot.slane %v1322, %v1389
    %v1391 = vlaneseq
    %v1392 = vshrl.u32 %v1391, 7
    %v1393 = vsub.s32 0, %v1392
    %v1394 = vrot.slane %v1330, %v1393
    %v1395 = vlaneseq
    %v1396 = vshrl.u32 %v1395, 7
    %v1397 = vsub.s32 0, %v1396
    %v1398 = vrot.slane %v1332, %v1397
    %v1399 = vlaneseq
    %v1400 = vshrl.u32 %v1399, 7
    %v1401 = vsub.s32 0, %v1400
    %v1402 = vrot.slane %v1315, %v1401
    %v1403 = vlaneseq
    %v1404 = vshrl.u32 %v1403, 7
    %v1405 = vsub.s32 0, %v1404
    %v1406 = vrot.slane %v1329, %v1405
    %v1407 = vlaneseq
    %v1408 = vshrl.u32 %v1407, 7
    %v1409 = vsub.s32 0, %v1408
    %v1410 = vrot.slane %v1331, %v1409
    %v1411 = vlaneseq
    %v1412 = vshrl.u32 %v1411, 7
    %v1413 = vsub.s32 0, %v1412
    %v1414 = vrot.slane %v1333, %v1413
    %v1415 = vlaneseq
    %v1416 = vshrl.u32 %v1415, 7
    %v1417 = vsub.s32 0, %v1416
    %v1418 = vrot.slane %v1357, %v1417
    %v1419 = vlaneseq
    %v1420 = vshrl.u32 %v1419, 7
    %v1421 = vsub.s32 0, %v1420
    %v1422 = vrot.slane %v1371, %v1421
    %v1423 = vlaneseq
    %v1424 = vshrl.u32 %v1423, 7
    %v1425 = vsub.s32 0, %v1424
    %v1426 = vrot.slane %v1379, %v1425
    %v1427 = vlaneseq
    %v1428 = vshrl.u32 %v1427, 7
    %v1429 = vsub.s32 0, %v1428
    %v1430 = vrot.slane %v1381, %v1429
    %v1431 = vlaneseq
    %v1432 = vshrl.u32 %v1431, 7
    %v1433 = vsub.s32 0, %v1432
    %v1434 = vrot.slane %v1364, %v1433
    %v1435 = vlaneseq
    %v1436 = vshrl.u32 %v1435, 7
    %v1437 = vsub.s32 0, %v1436
    %v1438 = vrot.slane %v1378, %v1437
    %v1439 = vlaneseq
    %v1440 = vshrl.u32 %v1439, 7
    %v1441 = vsub.s32 0, %v1440
    %v1442 = vrot.slane %v1380, %v1441
    %v1443 = vlaneseq
    %v1444 = vshrl.u32 %v1443, 7
    %v1445 = vsub.s32 0, %v1444
    %v1446 = vrot.slane %v1382, %v1445
    %v1463 = vmul.f32 %v1267, %v1386
    %v1464 = vmul.f32 %v1268, %v1390
    %v1465 = vmul.f32 %v1269, %v1394
    %v1466 = vmul.f32 %v1270, %v1398
    %v1467 = vmul.f32 %v1271, %v1402
    %v1468 = vmul.f32 %v1272, %v1406
    %v1469 = vmul.f32 %v1273, %v1410
    %v1470 = vmul.f32 %v1274, %v1414
    %v1471 = vmul.f32 %v1275, %v1418
    %v1472 = vmul.f32 %v1276, %v1422
    %v1473 = vmul.f32 %v1277, %v1426
    %v1474 = vmul.f32 %v1278, %v1430
    %v1475 = vmul.f32 %v1279, %v1434
    %v1476 = vmul.f32 %v1280, %v1438
    %v1477 = vmul.f32 %v1281, %v1442
    %v1478 = vmul.f32 %v1282, %v1446
    %v1479 = vadd.f32 %v1463, %v1464
    %v1480 = vadd.f32 %v1479, %v1465
    %v1481 = vadd.f32 %v1480, %v1466
    %v1482 = vadd.f32 %v1481, %v1467
    %v1483 = vadd.f32 %v1482, %v1468
    %v1484 = vadd.f32 %v1483, %v1469
    %v1485 = vadd.f32 %v1484, %v1470
    %v1486 = vadd.f32 %v1485, %v1471
    %v1487 = vadd.f32 %v1486, %v1472
    %v1488 = vadd.f32 %v1487, %v1473
    %v1489 = vadd.f32 %v1488, %v1474
    %v1490 = vadd.f32 %v1489, %v1475
    %v1491 = vadd.f32 %v1490, %v1476
    %v1492 = vadd.f32 %v1491, %v1477
    %v1493 = vadd.f32 %v1492, %v1478
    %1494 = vadd.xlane.f32.xlu0 %v1493
    %v1495 = vpop.xlane.xlu0 %1494
    %v1496 = vadd.f32 %v1249, %v1250
    %1497 = vadd.xlane.f32.xlu0 %v1496
    %v1498 = vpop.xlane.xlu0 %1497
    %v1499 = vrot.slane %v1498, 4
    %v1500 = vadd.f32 %v1498, %v1499
    %v1501 = vrot.slane %v1500, 2
    %v1502 = vadd.f32 %v1500, %v1501
    %v1503 = vrot.slane %v1502, 1
    %v1504 = vadd.f32 %v1502, %v1503
    %s1505 = vtos %v1504
    %1506 = vrot.lane.b32.xlu0 %v43, 2
    %v1507 = vpop.permute.xlu0 %1506
    %1508 = vrot.lane.b32.xlu0 %v44, 2
    %v1509 = vpop.permute.xlu0 %1508
    %1510 = vrot.lane.b32.xlu0 %v61, 2
    %v1511 = vpop.permute.xlu0 %1510
    %1512 = vrot.lane.b32.xlu0 %v62, 2
    %v1513 = vpop.permute.xlu0 %1512
    %1514 = vrot.lane.b32.xlu0 %v63, 2
    %v1515 = vpop.permute.xlu0 %1514
    %1516 = vrot.lane.b32.xlu0 %v64, 2
    %v1517 = vpop.permute.xlu0 %1516
    %1518 = vrot.lane.b32.xlu0 %v65, 2
    %v1519 = vpop.permute.xlu0 %1518
    %1520 = vrot.lane.b32.xlu0 %v66, 2
    %v1521 = vpop.permute.xlu0 %1520
    %1522 = vrot.lane.b32.xlu0 %v67, 2
    %v1523 = vpop.permute.xlu0 %1522
    %1524 = vrot.lane.b32.xlu0 %v68, 2
    %v1525 = vpop.permute.xlu0 %1524
    %1526 = vrot.lane.b32.xlu0 %v69, 2
    %v1527 = vpop.permute.xlu0 %1526
    %1528 = vrot.lane.b32.xlu0 %v70, 2
    %v1529 = vpop.permute.xlu0 %1528
    %1530 = vrot.lane.b32.xlu0 %v71, 2
    %v1531 = vpop.permute.xlu0 %1530
    %1532 = vrot.lane.b32.xlu0 %v72, 2
    %v1533 = vpop.permute.xlu0 %1532
    %1534 = vrot.lane.b32.xlu0 %v73, 2
    %v1535 = vpop.permute.xlu0 %1534
    %1536 = vrot.lane.b32.xlu0 %v74, 2
    %v1537 = vpop.permute.xlu0 %1536
    %1538 = vrot.lane.b32.xlu0 %v75, 2
    %v1539 = vpop.permute.xlu0 %1538
    %1540 = vrot.lane.b32.xlu0 %v76, 2
    %v1541 = vpop.permute.xlu0 %1540
    %v1542 = vmul.f32 %v43, %v1507
    %v1543 = vmul.f32 %v44, %v1509
    %v1544 = vsub.f32 %v61, %v1511
    %v1545 = vsub.f32 %v62, %v1513
    %v1546 = vsub.f32 %v63, %v1515
    %v1547 = vsub.f32 %v64, %v1517
    %v1548 = vsub.f32 %v65, %v1519
    %v1549 = vsub.f32 %v66, %v1521
    %v1550 = vsub.f32 %v67, %v1523
    %v1551 = vsub.f32 %v68, %v1525
    %v1552 = vsub.f32 %v69, %v1527
    %v1553 = vsub.f32 %v70, %v1529
    %v1554 = vsub.f32 %v71, %v1531
    %v1555 = vsub.f32 %v72, %v1533
    %v1556 = vsub.f32 %v73, %v1535
    %v1557 = vsub.f32 %v74, %v1537
    %v1558 = vsub.f32 %v75, %v1539
    %v1559 = vsub.f32 %v76, %v1541
    %v1560 = vand.u32 2147483647, %v1544
    %v1561 = vand.u32 2147483647, %v1545
    %v1562 = vand.u32 2147483647, %v1546
    %v1563 = vand.u32 2147483647, %v1547
    %v1564 = vand.u32 2147483647, %v1548
    %v1565 = vand.u32 2147483647, %v1549
    %v1566 = vand.u32 2147483647, %v1550
    %v1567 = vand.u32 2147483647, %v1551
    %v1568 = vand.u32 2147483647, %v1552
    %v1569 = vand.u32 2147483647, %v1553
    %v1570 = vand.u32 2147483647, %v1554
    %v1571 = vand.u32 2147483647, %v1555
    %v1572 = vand.u32 2147483647, %v1556
    %v1573 = vand.u32 2147483647, %v1557
    %v1574 = vand.u32 2147483647, %v1558
    %v1575 = vand.u32 2147483647, %v1559
    %v1578 = vcombine.high %v1542, %v1542
    %v1580 = vunpack.c.l.s4 1966171168
    %v1581 = vunpack.c.0.s8 %v1580
    %v1582 = vlaneseq
    %v1583 = vshrl.u32 %v1582, 7
    %v1584 = vsub.s32 %v1581, %v1583
    %v1585 = vrot.slane %v1542, %v1584
    %v1587 = vunpack.c.l.s4 1966171168
    %v1588 = vunpack.c.0.s8 %v1587
    %v1589 = vlaneseq
    %v1590 = vshrl.u32 %v1589, 7
    %v1591 = vsub.s32 %v1588, %v1590
    %v1592 = vrot.slane %v1578, %v1591
    %v1593 = vcombine.high %v1585, %v1585
    %v1594 = vcombine.high %v1592, %v1592
    %v1596 = vunpack.c.l.s4 1966171168
    %v1597 = vunpack.c.0.s8 %v1596
    %v1598 = vlaneseq
    %v1599 = vshrl.u32 %v1598, 7
    %v1600 = vsub.s32 %v1597, %v1599
    %v1601 = vrot.slane %v1585, %v1600
    %v1603 = vunpack.c.l.s4 1966171168
    %v1604 = vunpack.c.0.s8 %v1603
    %v1605 = vlaneseq
    %v1606 = vshrl.u32 %v1605, 7
    %v1607 = vsub.s32 %v1604, %v1606
    %v1608 = vrot.slane %v1592, %v1607
    %v1610 = vunpack.c.l.s4 1966171168
    %v1611 = vunpack.c.0.s8 %v1610
    %v1612 = vlaneseq
    %v1613 = vshrl.u32 %v1612, 7
    %v1614 = vsub.s32 %v1611, %v1613
    %v1615 = vrot.slane %v1593, %v1614
    %v1617 = vunpack.c.l.s4 1966171168
    %v1618 = vunpack.c.0.s8 %v1617
    %v1619 = vlaneseq
    %v1620 = vshrl.u32 %v1619, 7
    %v1621 = vsub.s32 %v1618, %v1620
    %v1622 = vrot.slane %v1594, %v1621
    %v1623 = vcombine.high %v1601, %v1601
    %v1624 = vcombine.high %v1608, %v1608
    %v1625 = vcombine.high %v1615, %v1615
    %v1626 = vcombine.high %v1622, %v1622
    %v1627 = vcombine.high %v1543, %v1543
    %v1629 = vunpack.c.l.s4 1966171168
    %v1630 = vunpack.c.0.s8 %v1629
    %v1631 = vlaneseq
    %v1632 = vshrl.u32 %v1631, 7
    %v1633 = vsub.s32 %v1630, %v1632
    %v1634 = vrot.slane %v1543, %v1633
    %v1636 = vunpack.c.l.s4 1966171168
    %v1637 = vunpack.c.0.s8 %v1636
    %v1638 = vlaneseq
    %v1639 = vshrl.u32 %v1638, 7
    %v1640 = vsub.s32 %v1637, %v1639
    %v1641 = vrot.slane %v1627, %v1640
    %v1642 = vcombine.high %v1634, %v1634
    %v1643 = vcombine.high %v1641, %v1641
    %v1645 = vunpack.c.l.s4 1966171168
    %v1646 = vunpack.c.0.s8 %v1645
    %v1647 = vlaneseq
    %v1648 = vshrl.u32 %v1647, 7
    %v1649 = vsub.s32 %v1646, %v1648
    %v1650 = vrot.slane %v1634, %v1649
    %v1652 = vunpack.c.l.s4 1966171168
    %v1653 = vunpack.c.0.s8 %v1652
    %v1654 = vlaneseq
    %v1655 = vshrl.u32 %v1654, 7
    %v1656 = vsub.s32 %v1653, %v1655
    %v1657 = vrot.slane %v1641, %v1656
    %v1659 = vunpack.c.l.s4 1966171168
    %v1660 = vunpack.c.0.s8 %v1659
    %v1661 = vlaneseq
    %v1662 = vshrl.u32 %v1661, 7
    %v1663 = vsub.s32 %v1660, %v1662
    %v1664 = vrot.slane %v1642, %v1663
    %v1666 = vunpack.c.l.s4 1966171168
    %v1667 = vunpack.c.0.s8 %v1666
    %v1668 = vlaneseq
    %v1669 = vshrl.u32 %v1668, 7
    %v1670 = vsub.s32 %v1667, %v1669
    %v1671 = vrot.slane %v1643, %v1670
    %v1672 = vcombine.high %v1650, %v1650
    %v1673 = vcombine.high %v1657, %v1657
    %v1674 = vcombine.high %v1664, %v1664
    %v1675 = vcombine.high %v1671, %v1671
    %v1676 = vlaneseq
    %v1677 = vshrl.u32 %v1676, 7
    %v1678 = vsub.s32 0, %v1677
    %v1679 = vrot.slane %v1601, %v1678
    %v1680 = vlaneseq
    %v1681 = vshrl.u32 %v1680, 7
    %v1682 = vsub.s32 0, %v1681
    %v1683 = vrot.slane %v1615, %v1682
    %v1684 = vlaneseq
    %v1685 = vshrl.u32 %v1684, 7
    %v1686 = vsub.s32 0, %v1685
    %v1687 = vrot.slane %v1623, %v1686
    %v1688 = vlaneseq
    %v1689 = vshrl.u32 %v1688, 7
    %v1690 = vsub.s32 0, %v1689
    %v1691 = vrot.slane %v1625, %v1690
    %v1692 = vlaneseq
    %v1693 = vshrl.u32 %v1692, 7
    %v1694 = vsub.s32 0, %v1693
    %v1695 = vrot.slane %v1608, %v1694
    %v1696 = vlaneseq
    %v1697 = vshrl.u32 %v1696, 7
    %v1698 = vsub.s32 0, %v1697
    %v1699 = vrot.slane %v1622, %v1698
    %v1700 = vlaneseq
    %v1701 = vshrl.u32 %v1700, 7
    %v1702 = vsub.s32 0, %v1701
    %v1703 = vrot.slane %v1624, %v1702
    %v1704 = vlaneseq
    %v1705 = vshrl.u32 %v1704, 7
    %v1706 = vsub.s32 0, %v1705
    %v1707 = vrot.slane %v1626, %v1706
    %v1708 = vlaneseq
    %v1709 = vshrl.u32 %v1708, 7
    %v1710 = vsub.s32 0, %v1709
    %v1711 = vrot.slane %v1650, %v1710
    %v1712 = vlaneseq
    %v1713 = vshrl.u32 %v1712, 7
    %v1714 = vsub.s32 0, %v1713
    %v1715 = vrot.slane %v1664, %v1714
    %v1716 = vlaneseq
    %v1717 = vshrl.u32 %v1716, 7
    %v1718 = vsub.s32 0, %v1717
    %v1719 = vrot.slane %v1672, %v1718
    %v1720 = vlaneseq
    %v1721 = vshrl.u32 %v1720, 7
    %v1722 = vsub.s32 0, %v1721
    %v1723 = vrot.slane %v1674, %v1722
    %v1724 = vlaneseq
    %v1725 = vshrl.u32 %v1724, 7
    %v1726 = vsub.s32 0, %v1725
    %v1727 = vrot.slane %v1657, %v1726
    %v1728 = vlaneseq
    %v1729 = vshrl.u32 %v1728, 7
    %v1730 = vsub.s32 0, %v1729
    %v1731 = vrot.slane %v1671, %v1730
    %v1732 = vlaneseq
    %v1733 = vshrl.u32 %v1732, 7
    %v1734 = vsub.s32 0, %v1733
    %v1735 = vrot.slane %v1673, %v1734
    %v1736 = vlaneseq
    %v1737 = vshrl.u32 %v1736, 7
    %v1738 = vsub.s32 0, %v1737
    %v1739 = vrot.slane %v1675, %v1738
    %v1756 = vmul.f32 %v1560, %v1679
    %v1757 = vmul.f32 %v1561, %v1683
    %v1758 = vmul.f32 %v1562, %v1687
    %v1759 = vmul.f32 %v1563, %v1691
    %v1760 = vmul.f32 %v1564, %v1695
    %v1761 = vmul.f32 %v1565, %v1699
    %v1762 = vmul.f32 %v1566, %v1703
    %v1763 = vmul.f32 %v1567, %v1707
    %v1764 = vmul.f32 %v1568, %v1711
    %v1765 = vmul.f32 %v1569, %v1715
    %v1766 = vmul.f32 %v1570, %v1719
    %v1767 = vmul.f32 %v1571, %v1723
    %v1768 = vmul.f32 %v1572, %v1727
    %v1769 = vmul.f32 %v1573, %v1731
    %v1770 = vmul.f32 %v1574, %v1735
    %v1771 = vmul.f32 %v1575, %v1739
    %v1772 = vadd.f32 %v1756, %v1757
    %v1773 = vadd.f32 %v1772, %v1758
    %v1774 = vadd.f32 %v1773, %v1759
    %v1775 = vadd.f32 %v1774, %v1760
    %v1776 = vadd.f32 %v1775, %v1761
    %v1777 = vadd.f32 %v1776, %v1762
    %v1778 = vadd.f32 %v1777, %v1763
    %v1779 = vadd.f32 %v1778, %v1764
    %v1780 = vadd.f32 %v1779, %v1765
    %v1781 = vadd.f32 %v1780, %v1766
    %v1782 = vadd.f32 %v1781, %v1767
    %v1783 = vadd.f32 %v1782, %v1768
    %v1784 = vadd.f32 %v1783, %v1769
    %v1785 = vadd.f32 %v1784, %v1770
    %v1786 = vadd.f32 %v1785, %v1771
    %1787 = vadd.xlane.f32.xlu0 %v1786
    %v1788 = vpop.xlane.xlu0 %1787
    %v1789 = vadd.f32 %v1542, %v1543
    %1790 = vadd.xlane.f32.xlu0 %v1789
    %v1791 = vpop.xlane.xlu0 %1790
    %v1792 = vrot.slane %v1791, 4
    %v1793 = vadd.f32 %v1791, %v1792
    %v1794 = vrot.slane %v1793, 2
    %v1795 = vadd.f32 %v1793, %v1794
    %v1796 = vrot.slane %v1795, 1
    %v1797 = vadd.f32 %v1795, %v1796
    %s1798 = vtos %v1797
    %1799 = vrot.lane.b32.xlu0 %v43, 3
    %v1800 = vpop.permute.xlu0 %1799
    %1801 = vrot.lane.b32.xlu0 %v44, 3
    %v1802 = vpop.permute.xlu0 %1801
    %1803 = vrot.lane.b32.xlu0 %v61, 3
    %v1804 = vpop.permute.xlu0 %1803
    %1805 = vrot.lane.b32.xlu0 %v62, 3
    %v1806 = vpop.permute.xlu0 %1805
    %1807 = vrot.lane.b32.xlu0 %v63, 3
    %v1808 = vpop.permute.xlu0 %1807
    %1809 = vrot.lane.b32.xlu0 %v64, 3
    %v1810 = vpop.permute.xlu0 %1809
    %1811 = vrot.lane.b32.xlu0 %v65, 3
    %v1812 = vpop.permute.xlu0 %1811
    %1813 = vrot.lane.b32.xlu0 %v66, 3
    %v1814 = vpop.permute.xlu0 %1813
    %1815 = vrot.lane.b32.xlu0 %v67, 3
    %v1816 = vpop.permute.xlu0 %1815
    %1817 = vrot.lane.b32.xlu0 %v68, 3
    %v1818 = vpop.permute.xlu0 %1817
    %1819 = vrot.lane.b32.xlu0 %v69, 3
    %v1820 = vpop.permute.xlu0 %1819
    %1821 = vrot.lane.b32.xlu0 %v70, 3
    %v1822 = vpop.permute.xlu0 %1821
    %1823 = vrot.lane.b32.xlu0 %v71, 3
    %v1824 = vpop.permute.xlu0 %1823
    %1825 = vrot.lane.b32.xlu0 %v72, 3
    %v1826 = vpop.permute.xlu0 %1825
    %1827 = vrot.lane.b32.xlu0 %v73, 3
    %v1828 = vpop.permute.xlu0 %1827
    %1829 = vrot.lane.b32.xlu0 %v74, 3
    %v1830 = vpop.permute.xlu0 %1829
    %1831 = vrot.lane.b32.xlu0 %v75, 3
    %v1832 = vpop.permute.xlu0 %1831
    %1833 = vrot.lane.b32.xlu0 %v76, 3
    %v1834 = vpop.permute.xlu0 %1833
    %v1835 = vmul.f32 %v43, %v1800
    %v1836 = vmul.f32 %v44, %v1802
    %v1837 = vsub.f32 %v61, %v1804
    %v1838 = vsub.f32 %v62, %v1806
    %v1839 = vsub.f32 %v63, %v1808
    %v1840 = vsub.f32 %v64, %v1810
    %v1841 = vsub.f32 %v65, %v1812
    %v1842 = vsub.f32 %v66, %v1814
    %v1843 = vsub.f32 %v67, %v1816
    %v1844 = vsub.f32 %v68, %v1818
    %v1845 = vsub.f32 %v69, %v1820
    %v1846 = vsub.f32 %v70, %v1822
    %v1847 = vsub.f32 %v71, %v1824
    %v1848 = vsub.f32 %v72, %v1826
    %v1849 = vsub.f32 %v73, %v1828
    %v1850 = vsub.f32 %v74, %v1830
    %v1851 = vsub.f32 %v75, %v1832
    %v1852 = vsub.f32 %v76, %v1834
    %v1853 = vand.u32 2147483647, %v1837
    %v1854 = vand.u32 2147483647, %v1838
    %v1855 = vand.u32 2147483647, %v1839
    %v1856 = vand.u32 2147483647, %v1840
    %v1857 = vand.u32 2147483647, %v1841
    %v1858 = vand.u32 2147483647, %v1842
    %v1859 = vand.u32 2147483647, %v1843
    %v1860 = vand.u32 2147483647, %v1844
    %v1861 = vand.u32 2147483647, %v1845
    %v1862 = vand.u32 2147483647, %v1846
    %v1863 = vand.u32 2147483647, %v1847
    %v1864 = vand.u32 2147483647, %v1848
    %v1865 = vand.u32 2147483647, %v1849
    %v1866 = vand.u32 2147483647, %v1850
    %v1867 = vand.u32 2147483647, %v1851
    %v1868 = vand.u32 2147483647, %v1852
    %v1871 = vcombine.high %v1835, %v1835
    %v1873 = vunpack.c.l.s4 1966171168
    %v1874 = vunpack.c.0.s8 %v1873
    %v1875 = vlaneseq
    %v1876 = vshrl.u32 %v1875, 7
    %v1877 = vsub.s32 %v1874, %v1876
    %v1878 = vrot.slane %v1835, %v1877
    %v1880 = vunpack.c.l.s4 1966171168
    %v1881 = vunpack.c.0.s8 %v1880
    %v1882 = vlaneseq
    %v1883 = vshrl.u32 %v1882, 7
    %v1884 = vsub.s32 %v1881, %v1883
    %v1885 = vrot.slane %v1871, %v1884
    %v1886 = vcombine.high %v1878, %v1878
    %v1887 = vcombine.high %v1885, %v1885
    %v1889 = vunpack.c.l.s4 1966171168
    %v1890 = vunpack.c.0.s8 %v1889
    %v1891 = vlaneseq
    %v1892 = vshrl.u32 %v1891, 7
    %v1893 = vsub.s32 %v1890, %v1892
    %v1894 = vrot.slane %v1878, %v1893
    %v1896 = vunpack.c.l.s4 1966171168
    %v1897 = vunpack.c.0.s8 %v1896
    %v1898 = vlaneseq
    %v1899 = vshrl.u32 %v1898, 7
    %v1900 = vsub.s32 %v1897, %v1899
    %v1901 = vrot.slane %v1885, %v1900
    %v1903 = vunpack.c.l.s4 1966171168
    %v1904 = vunpack.c.0.s8 %v1903
    %v1905 = vlaneseq
    %v1906 = vshrl.u32 %v1905, 7
    %v1907 = vsub.s32 %v1904, %v1906
    %v1908 = vrot.slane %v1886, %v1907
    %v1910 = vunpack.c.l.s4 1966171168
    %v1911 = vunpack.c.0.s8 %v1910
    %v1912 = vlaneseq
    %v1913 = vshrl.u32 %v1912, 7
    %v1914 = vsub.s32 %v1911, %v1913
    %v1915 = vrot.slane %v1887, %v1914
    %v1916 = vcombine.high %v1894, %v1894
    %v1917 = vcombine.high %v1901, %v1901
    %v1918 = vcombine.high %v1908, %v1908
    %v1919 = vcombine.high %v1915, %v1915
    %v1920 = vcombine.high %v1836, %v1836
    %v1922 = vunpack.c.l.s4 1966171168
    %v1923 = vunpack.c.0.s8 %v1922
    %v1924 = vlaneseq
    %v1925 = vshrl.u32 %v1924, 7
    %v1926 = vsub.s32 %v1923, %v1925
    %v1927 = vrot.slane %v1836, %v1926
    %v1929 = vunpack.c.l.s4 1966171168
    %v1930 = vunpack.c.0.s8 %v1929
    %v1931 = vlaneseq
    %v1932 = vshrl.u32 %v1931, 7
    %v1933 = vsub.s32 %v1930, %v1932
    %v1934 = vrot.slane %v1920, %v1933
    %v1935 = vcombine.high %v1927, %v1927
    %v1936 = vcombine.high %v1934, %v1934
    %v1938 = vunpack.c.l.s4 1966171168
    %v1939 = vunpack.c.0.s8 %v1938
    %v1940 = vlaneseq
    %v1941 = vshrl.u32 %v1940, 7
    %v1942 = vsub.s32 %v1939, %v1941
    %v1943 = vrot.slane %v1927, %v1942
    %v1945 = vunpack.c.l.s4 1966171168
    %v1946 = vunpack.c.0.s8 %v1945
    %v1947 = vlaneseq
    %v1948 = vshrl.u32 %v1947, 7
    %v1949 = vsub.s32 %v1946, %v1948
    %v1950 = vrot.slane %v1934, %v1949
    %v1952 = vunpack.c.l.s4 1966171168
    %v1953 = vunpack.c.0.s8 %v1952
    %v1954 = vlaneseq
    %v1955 = vshrl.u32 %v1954, 7
    %v1956 = vsub.s32 %v1953, %v1955
    %v1957 = vrot.slane %v1935, %v1956
    %v1959 = vunpack.c.l.s4 1966171168
    %v1960 = vunpack.c.0.s8 %v1959
    %v1961 = vlaneseq
    %v1962 = vshrl.u32 %v1961, 7
    %v1963 = vsub.s32 %v1960, %v1962
    %v1964 = vrot.slane %v1936, %v1963
    %v1965 = vcombine.high %v1943, %v1943
    %v1966 = vcombine.high %v1950, %v1950
    %v1967 = vcombine.high %v1957, %v1957
    %v1968 = vcombine.high %v1964, %v1964
    %v1969 = vlaneseq
    %v1970 = vshrl.u32 %v1969, 7
    %v1971 = vsub.s32 0, %v1970
    %v1972 = vrot.slane %v1894, %v1971
    %v1973 = vlaneseq
    %v1974 = vshrl.u32 %v1973, 7
    %v1975 = vsub.s32 0, %v1974
    %v1976 = vrot.slane %v1908, %v1975
    %v1977 = vlaneseq
    %v1978 = vshrl.u32 %v1977, 7
    %v1979 = vsub.s32 0, %v1978
    %v1980 = vrot.slane %v1916, %v1979
    %v1981 = vlaneseq
    %v1982 = vshrl.u32 %v1981, 7
    %v1983 = vsub.s32 0, %v1982
    %v1984 = vrot.slane %v1918, %v1983
    %v1985 = vlaneseq
    %v1986 = vshrl.u32 %v1985, 7
    %v1987 = vsub.s32 0, %v1986
    %v1988 = vrot.slane %v1901, %v1987
    %v1989 = vlaneseq
    %v1990 = vshrl.u32 %v1989, 7
    %v1991 = vsub.s32 0, %v1990
    %v1992 = vrot.slane %v1915, %v1991
    %v1993 = vlaneseq
    %v1994 = vshrl.u32 %v1993, 7
    %v1995 = vsub.s32 0, %v1994
    %v1996 = vrot.slane %v1917, %v1995
    %v1997 = vlaneseq
    %v1998 = vshrl.u32 %v1997, 7
    %v1999 = vsub.s32 0, %v1998
    %v2000 = vrot.slane %v1919, %v1999
    %v2001 = vlaneseq
    %v2002 = vshrl.u32 %v2001, 7
    %v2003 = vsub.s32 0, %v2002
    %v2004 = vrot.slane %v1943, %v2003
    %v2005 = vlaneseq
    %v2006 = vshrl.u32 %v2005, 7
    %v2007 = vsub.s32 0, %v2006
    %v2008 = vrot.slane %v1957, %v2007
    %v2009 = vlaneseq
    %v2010 = vshrl.u32 %v2009, 7
    %v2011 = vsub.s32 0, %v2010
    %v2012 = vrot.slane %v1965, %v2011
    %v2013 = vlaneseq
    %v2014 = vshrl.u32 %v2013, 7
    %v2015 = vsub.s32 0, %v2014
    %v2016 = vrot.slane %v1967, %v2015
    %v2017 = vlaneseq
    %v2018 = vshrl.u32 %v2017, 7
    %v2019 = vsub.s32 0, %v2018
    %v2020 = vrot.slane %v1950, %v2019
    %v2021 = vlaneseq
    %v2022 = vshrl.u32 %v2021, 7
    %v2023 = vsub.s32 0, %v2022
    %v2024 = vrot.slane %v1964, %v2023
    %v2025 = vlaneseq
    %v2026 = vshrl.u32 %v2025, 7
    %v2027 = vsub.s32 0, %v2026
    %v2028 = vrot.slane %v1966, %v2027
    %v2029 = vlaneseq
    %v2030 = vshrl.u32 %v2029, 7
    %v2031 = vsub.s32 0, %v2030
    %v2032 = vrot.slane %v1968, %v2031
    %v2049 = vmul.f32 %v1853, %v1972
    %v2050 = vmul.f32 %v1854, %v1976
    %v2051 = vmul.f32 %v1855, %v1980
    %v2052 = vmul.f32 %v1856, %v1984
    %v2053 = vmul.f32 %v1857, %v1988
    %v2054 = vmul.f32 %v1858, %v1992
    %v2055 = vmul.f32 %v1859, %v1996
    %v2056 = vmul.f32 %v1860, %v2000
    %v2057 = vmul.f32 %v1861, %v2004
    %v2058 = vmul.f32 %v1862, %v2008
    %v2059 = vmul.f32 %v1863, %v2012
    %v2060 = vmul.f32 %v1864, %v2016
    %v2061 = vmul.f32 %v1865, %v2020
    %v2062 = vmul.f32 %v1866, %v2024
    %v2063 = vmul.f32 %v1867, %v2028
    %v2064 = vmul.f32 %v1868, %v2032
    %v2065 = vadd.f32 %v2049, %v2050
    %v2066 = vadd.f32 %v2065, %v2051
    %v2067 = vadd.f32 %v2066, %v2052
    %v2068 = vadd.f32 %v2067, %v2053
    %v2069 = vadd.f32 %v2068, %v2054
    %v2070 = vadd.f32 %v2069, %v2055
    %v2071 = vadd.f32 %v2070, %v2056
    %v2072 = vadd.f32 %v2071, %v2057
    %v2073 = vadd.f32 %v2072, %v2058
    %v2074 = vadd.f32 %v2073, %v2059
    %v2075 = vadd.f32 %v2074, %v2060
    %v2076 = vadd.f32 %v2075, %v2061
    %v2077 = vadd.f32 %v2076, %v2062
    %v2078 = vadd.f32 %v2077, %v2063
    %v2079 = vadd.f32 %v2078, %v2064
    %2080 = vadd.xlane.f32.xlu0 %v2079
    %v2081 = vpop.xlane.xlu0 %2080
    %v2082 = vadd.f32 %v1835, %v1836
    %2083 = vadd.xlane.f32.xlu0 %v2082
    %v2084 = vpop.xlane.xlu0 %2083
    %v2085 = vrot.slane %v2084, 4
    %v2086 = vadd.f32 %v2084, %v2085
    %v2087 = vrot.slane %v2086, 2
    %v2088 = vadd.f32 %v2086, %v2087
    %v2089 = vrot.slane %v2088, 1
    %v2090 = vadd.f32 %v2088, %v2089
    %s2091 = vtos %v2090
    %v2093 = vlaneseq
    %v2094 = vand.u32 %v2093, 127
    %v2095 = vlaneseq
    %v2096 = vshrl.u32 %v2095, 7
    %v2097 = vsub.s32 %v2094, %v2096
    %v2098 = vrot.slane %v359, %v2097
    %v2101 = vlaneseq
    %v2102 = vshrl.u32 %v2101, 7
    %v2103 = vsub.s32 %v2094, %v2102
    %v2104 = vrot.slane %v652, %v2103
    %v2107 = vlaneseq
    %v2108 = vshrl.u32 %v2107, 7
    %v2109 = vsub.s32 %v2094, %v2108
    %v2110 = vrot.slane %v945, %v2109
    %v2113 = vlaneseq
    %v2114 = vshrl.u32 %v2113, 7
    %v2115 = vsub.s32 %v2094, %v2114
    %v2116 = vrot.slane %v1202, %v2115
    %v2119 = vlaneseq
    %v2120 = vshrl.u32 %v2119, 7
    %v2121 = vsub.s32 %v2094, %v2120
    %v2122 = vrot.slane %v1495, %v2121
    %v2125 = vlaneseq
    %v2126 = vshrl.u32 %v2125, 7
    %v2127 = vsub.s32 %v2094, %v2126
    %v2128 = vrot.slane %v1788, %v2127
    %v2131 = vlaneseq
    %v2132 = vshrl.u32 %v2131, 7
    %v2133 = vsub.s32 %v2094, %v2132
    %v2134 = vrot.slane %v2081, %v2133
    %vm2136 = vcmask 1040384
    %v2137 = vsel %vm2136, %v2098, %v2104
    %vm2138 = vcmask 1041408
    %v2139 = vsel %vm2138, %v2137, %v2110
    %vm2140 = vcmask 1042432
    %v2141 = vsel %vm2140, %v2139, %v2116
    %vm2142 = vcmask 1043456
    %v2143 = vsel %vm2142, %v2141, %v2122
    %vm2144 = vcmask 1044480
    %v2145 = vsel %vm2144, %v2143, %v2128
    %vm2146 = vcmask 1045504
    %v2147 = vsel %vm2146, %v2145, %v2134
    %vm2148 = vcmask 63488
    %2149 = vst.msk [vmem:[%s2] sm:$0x7f] %vm2148, %v2147
    %v2150 = vstv %s369
    %v2151 = vstv %s662
    %v2152 = vstv %s955
    %v2153 = vstv %s1212
    %v2154 = vstv %s1505
    %v2155 = vstv %s1798
    %v2156 = vstv %s2091
    %v2157 = vlaneseq
    %vm2158 = vcmp.ge.s32.totalorder %v2157, 0
    %vm2159 = vcmp.lt.s32.totalorder %v2157, 1
    %vm2160 = vmand %vm2158, %vm2159
    %v2161 = vsel %vm2160, %v2150, %v2151
    %vm2162 = vcmp.lt.s32.totalorder %v2157, 2
    %vm2163 = vmand %vm2158, %vm2162
    %v2164 = vsel %vm2163, %v2161, %v2152
    %vm2165 = vcmp.lt.s32.totalorder %v2157, 3
    %vm2166 = vmand %vm2158, %vm2165
    %v2167 = vsel %vm2166, %v2164, %v2153
    %vm2168 = vcmp.lt.s32.totalorder %v2157, 4
    %vm2169 = vmand %vm2158, %vm2168
    %v2170 = vsel %vm2169, %v2167, %v2154
    %vm2171 = vcmp.lt.s32.totalorder %v2157, 5
    %vm2172 = vmand %vm2158, %vm2171
    %v2173 = vsel %vm2172, %v2170, %v2155
    %vm2174 = vcmp.lt.s32.totalorder %v2157, 6
    %vm2175 = vmand %vm2158, %vm2174
    %v2176 = vsel %vm2175, %v2173, %v2156
    %v2177 = vlaneseq
    %v2178 = vshrl.u32 %v2177, 7
    %v2179 = vsub.s32 0, %v2178
    %v2180 = vrot.slane %v2176, %v2179
    %2182 = vbcast.lane.b32.xlu0 %v2180, 256
    %v2183 = vpop.permute.xlu0 %2182
    %vm2184 = vcmask 6144
    %2185 = vst.msk [vmem:[%s3] sm:$0x7f] %vm2184, %v2183
    // Predicated region
    $region18: #{tpu_custom_call.1} parent=1 // pred_check
      _
    $region19: #{tpu_custom_call.1} parent=1 // pred_check_branch
      %2187 = sbr.rel (0) target = $region21
    $region20: #{tpu_custom_call.1} parent=1 // pred_region
      _
    $region21: #{tpu_custom_call.1} parent=1 // pred_fallthru
      _
    // Predicated region
    $region22: #{tpu_custom_call.1} parent=1 // pred_check
      _
    $region23: #{tpu_custom_call.1} parent=1 // pred_check_branch
      %2189 = sbr.rel (0) target = $region25
    $region24: #{tpu_custom_call.1} parent=1 // pred_region
      _
    $region25: #{tpu_custom_call.1} parent=1 // pred_fallthru
      _
    // Predicated region
    $region26: #{tpu_custom_call.1} parent=1 // pred_check
      _
    $region27: #{tpu_custom_call.1} parent=1 // pred_check_branch
      %2191 = sbr.rel (0) target = $region29
    $region28: #{tpu_custom_call.1} parent=1 // pred_region
      _
    $region29: #{tpu_custom_call.1} parent=1 // pred_fallthru
      _
    // Predicated region
    $region30: #{tpu_custom_call.1} parent=1 // pred_check
      _
    $region31: #{tpu_custom_call.1} parent=1 // pred_check_branch
      %2193 = sbr.rel (0) target = $region33
    $region32: #{tpu_custom_call.1} parent=1 // pred_region
      _
    $region33: #{tpu_custom_call.1} parent=1 // pred_fallthru
      _
    %2194 = vsyncpa [#allocation3], 1
    %2195 = vsyncpa [#allocation5], 1

</llo_original>
